<compile_context>
chip_gen: v7x
topology: tpu7x:2x2x1
jax: 0.10.0
libtpu: 0.0.40
codegen_flags: <defaults>
</compile_context>

<pallas_src>
import jax
import jax.numpy as jnp
import numpy as np
from jax.experimental import pallas as pl
from jax.experimental.pallas import tpu as pltpu


def discourse_kernel(x_ref, wih_ref, whh_ref, b_ref, w3_ref, b3_ref, w4_ref, b4_ref,
                     inner_ref, doc_ref):
    S, Bb, D = x_ref.shape            # sentences, documents in this block, 2*hidden
    L = wih_ref.shape[0]
    G = 4 * D

    # Lane mask selecting the g-gate block of the [f, i, o, g] layout.  Hoisted:
    # JAX does not CSE broadcast_in_dim, so build it once, not per timestep.
    lane = jax.lax.broadcasted_iota(jnp.int32, (Bb, G), 1)
    g_mask = lane >= 3 * D

    # ---- multi-layer unidirectional LSTM over S timesteps, batched over Bb docs ----
    # TODO(synk): nn.Dropout is treated as identity (inference-mode forward).
    layer_in = x_ref[...]                                        # (S, Bb, D) f32
    for l in range(L):
        wih = wih_ref[l]                                         # (D, 4D) bf16, [f,i,o,g]
        whh = whh_ref[l]                                         # (D, 4D) bf16
        b = b_ref[l]                                             # (1, 4D) f32 = b_ih + b_hh

        # Hoisted input projection for the whole sequence: one (S*Bb, D)@(D, 4D)
        # MXU matmul instead of S per-step matmuls on the serial chain.
        pre = jnp.dot(layer_in.reshape(S * Bb, D).astype(jnp.bfloat16), wih,
                      preferred_element_type=jnp.float32) + b    # (S*Bb, 4D) f32
        pre = pre.reshape(S, Bb, G)                              # (S, Bb, 4D)

        h = jnp.zeros((Bb, D), jnp.float32)
        c = jnp.zeros((Bb, D), jnp.float32)
        hs = []
        # S is a static Python int -> fully unrolled recurrence, static indices.
        # TODO(synk): hold whh in MXU staging regs across steps (matmul_push_rhs).
        for t in range(S):
            gates = pre[t] + jnp.dot(h.astype(jnp.bfloat16), whh,
                                     preferred_element_type=jnp.float32)    # (Bb, 4D)
            # Activated gates in [f, i, o, g] lane order: one full-width sigmoid +
            # one full-width tanh (EUP) merged with a lane select.
            a = jnp.where(g_mask, jnp.tanh(gates), jax.nn.sigmoid(gates))
            # Half-width circular roll -> [o, g, f, i].  shift = 2D is its own
            # inverse on a 4D-wide axis, so the result is independent of the roll
            # direction convention.
            r = pltpu.roll(a, shift=2 * D, axis=1)
            prod = a * r                                         # lanes [D:2D] = i*g
            f_g = a[:, :D]                                       # offset-0 slice: free
            o_g = r[:, :D]                                       # offset-0 slice: free
            ig = prod[:, D:2 * D]                                # the single rotated slice
            c = f_g * c + ig
            h = o_g * jnp.tanh(c)
            hs.append(h)                                         # stays in vregs (SSA)
        layer_in = jnp.stack(hs, axis=0)                         # (S, Bb, D)

    inner = layer_in
    inner_ref[...] = inner                                       # single contiguous writeback

    # ---- self-attention pooling: tanh(ws3(h)) -> ws4 -> softmax over S -> sum ----
    flat = inner.reshape(S * Bb, D)
    h3 = jnp.tanh(jnp.dot(flat.astype(jnp.bfloat16), w3_ref[...],
                          preferred_element_type=jnp.float32) + b3_ref[...])   # (S*Bb, D)
    h3 = h3.reshape(S, Bb, D)
    att = jnp.sum(h3 * w4_ref[...], axis=-1, keepdims=True) + b4_ref[...]      # (S, Bb, 1)
    att = att - jnp.max(att, axis=0, keepdims=True)
    e = jnp.exp(att)
    p = e / jnp.sum(e, axis=0, keepdims=True)   # exact reciprocal: runs once, cheap
    doc_ref[...] = jnp.sum(inner * p, axis=0)                                  # (Bb, D)


_GATE_BLOCKS = (1, 0, 3, 2)   # PyTorch gate order [i, f, g, o] -> kernel [f, i, o, g]


def _permute_gates(w, D, axis):
    idx = np.concatenate([np.arange(b * D, (b + 1) * D) for b in _GATE_BLOCKS])
    return jnp.take(w, jnp.asarray(idx), axis=axis)


def discourse_encoder_pallas_batched(sent_encodings, params, doc_block=None):
    """sent_encodings: (B, S, D) -> inner (B, S, D), doc (B, D)."""
    xs = sent_encodings.astype(jnp.float32)
    B, S, D = xs.shape
    if doc_block is None:
        doc_block = 8 if B % 8 == 0 else B
    assert B % doc_block == 0
    nb = B // doc_block

    # LSTM weights: gate columns permuted to [f, i, o, g], pre-transposed to
    # (in, out), cast to bf16 (f32 accumulation requested in-kernel).
    wih_t = jnp.transpose(_permute_gates(params["wih"], D, axis=1),
                          (0, 2, 1)).astype(jnp.bfloat16)        # (L, D, 4D)
    whh_t = jnp.transpose(_permute_gates(params["whh"], D, axis=1),
                          (0, 2, 1)).astype(jnp.bfloat16)        # (L, D, 4D)
    b_k = _permute_gates(params["bih"] + params["bhh"], D, axis=1)[:, None, :]  # (L, 1, 4D)
    w3_t = params["w3"].T.astype(jnp.bfloat16)                   # (D, D)
    b3 = params["b3"][None, :]                                   # (1, D)
    w4 = params["w4"]                                            # (1, D)
    b4 = params["b4"][None, :]                                   # (1, 1)

    # Documents on the second axis so each grid step sees a contiguous (S, Bb, D)
    # block and per-step extraction / h-row stacking happen on the major axis.
    xs_t = jnp.transpose(xs, (1, 0, 2))                          # (S, B, D)

    def full_spec(shape):
        n = len(shape)
        return pl.BlockSpec(shape, lambda i, _n=n: (0,) * _n)

    inner_t, doc = pl.pallas_call(
        discourse_kernel,
        out_shape=(jax.ShapeDtypeStruct((S, B, D), jnp.float32),
                   jax.ShapeDtypeStruct((B, D), jnp.float32)),
        grid_spec=pltpu.PrefetchScalarGridSpec(
            num_scalar_prefetch=0,
            grid=(nb,),
            in_specs=[pl.BlockSpec((S, doc_block, D), lambda i: (0, i, 0)),
                      full_spec(wih_t.shape), full_spec(whh_t.shape),
                      full_spec(b_k.shape), full_spec(w3_t.shape),
                      full_spec(b3.shape), full_spec(w4.shape), full_spec(b4.shape)],
            out_specs=(pl.BlockSpec((S, doc_block, D), lambda i: (0, i, 0)),
                       pl.BlockSpec((doc_block, D), lambda i: (i, 0))),
        ),
        compiler_params=pltpu.CompilerParams(dimension_semantics=("parallel",)),
    )(xs_t, wih_t, whh_t, b_k, w3_t, b3, w4, b4)

    return jnp.transpose(inner_t, (1, 0, 2)), doc                # (B, S, D), (B, D)


def discourse_encoder_pallas(sent_encoding, params):
    """Module-equivalent forward: (S, D) -> (inner_pred (1, S, D), doc (1, D))."""
    inner, doc = discourse_encoder_pallas_batched(sent_encoding[None, :, :], params)
    return inner, doc


def make_params(key, hidden_dim, num_layers):
    D = 2 * hidden_dim
    ks = jax.random.split(key, 6)
    s = 0.1
    return dict(
        wih=jax.random.normal(ks[0], (num_layers, 4 * D, D), jnp.float32) * s,
        whh=jax.random.normal(ks[1], (num_layers, 4 * D, D), jnp.float32) * s,
        bih=jax.random.normal(ks[2], (num_layers, 4 * D), jnp.float32) * s,
        bhh=jax.random.normal(ks[3], (num_layers, 4 * D), jnp.float32) * s,
        w3=jax.random.normal(ks[4], (D, D), jnp.float32) * s,
        b3=jnp.zeros((D,), jnp.float32),
        w4=jax.random.normal(ks[5], (1, D), jnp.float32) * s,
        b4=jnp.zeros((1,), jnp.float32),
    )


def discourse_encoder_ref(sent_encoding, params):
    """Pure-JAX f32 reference with PyTorch gate order (dropout = identity)."""
    x = sent_encoding.astype(jnp.float32)
    S, D = x.shape
    L = params["wih"].shape[0]
    h_seq = x
    for l in range(L):
        wih_t = params["wih"][l].T
        whh_t = params["whh"][l].T
        b = params["bih"][l] + params["bhh"][l]
        h = jnp.zeros((1, D), jnp.float32)
        c = jnp.zeros((1, D), jnp.float32)
        outs = []
        for t in range(S):
            x_t = h_seq[t:t + 1]
            gates = x_t @ wih_t + h @ whh_t + b
            i_g = jax.nn.sigmoid(gates[:, 0:D])
            f_g = jax.nn.sigmoid(gates[:, D:2 * D])
            g_g = jnp.tanh(gates[:, 2 * D:3 * D])
            o_g = jax.nn.sigmoid(gates[:, 3 * D:4 * D])
            c = f_g * c + i_g * g_g
            h = o_g * jnp.tanh(c)
            outs.append(h)
        h_seq = jnp.concatenate(outs, axis=0)
    inner = h_seq
    h3 = jnp.tanh(inner @ params["w3"].T + params["b3"])
    att = (h3 @ params["w4"].T + params["b4"])[:, 0]
    p = jax.nn.softmax(att)
    doc = jnp.sum(inner * p[:, None], axis=0, keepdims=True)
    return inner[None], doc


if __name__ == "__main__":
    hidden_dim = 16          # config['hidden_dim']  -> D = 2*hidden_dim = 32
    num_layers = 2           # config['num_layers']
    S = 8                    # sentences per document
    D = 2 * hidden_dim

    key = jax.random.PRNGKey(0)
    k_param, k_x, k_xb = jax.random.split(key, 3)
    params = make_params(k_param, hidden_dim, num_layers)

    # 1) Module-equivalent single-document forward (B = 1, grid = (1,)).
    sent_encoding = jax.random.normal(k_x, (S, D), jnp.float32)
    inner, doc = discourse_encoder_pallas(sent_encoding, params)
    inner = jax.block_until_ready(inner)
    doc = jax.block_until_ready(doc)
    inner_r, doc_r = discourse_encoder_ref(sent_encoding, params)
    assert inner.shape == (1, S, D) and doc.shape == (1, D)
    # Tolerance accounts for bf16 MXU operands (with f32 accumulation).
    assert np.allclose(np.asarray(inner), np.asarray(inner_r), atol=2e-2, rtol=2e-2)
    assert np.allclose(np.asarray(doc), np.asarray(doc_r), atol=2e-2, rtol=2e-2)

    # 2) Batched documents: 16 docs, 8 per grid step -> grid=(2,) on a "parallel" axis
    #    (fills MXU rows in the recurrence and both TensorCores on v7x).
    xs = jax.random.normal(k_xb, (16, S, D), jnp.float32)
    inner_b, doc_b = discourse_encoder_pallas_batched(xs, params)
    inner_b = jax.block_until_ready(inner_b)
    doc_b = jax.block_until_ready(doc_b)
    inner_rb, doc_rb = jax.jit(jax.vmap(lambda x: discourse_encoder_ref(x, params)))(xs)
    assert np.allclose(np.asarray(inner_b), np.asarray(inner_rb[:, 0]), atol=2e-2, rtol=2e-2)
    assert np.allclose(np.asarray(doc_b), np.asarray(doc_rb[:, 0]), atol=2e-2, rtol=2e-2)

    print("KERNEL_OK")
</pallas_src>

<mosaic_0001>
module attributes {stable_mosaic.version = 11 : i64} {
  func.func @discourse_kernel(%arg0: i32, %arg1: memref<8x1x32xf32, #tpu.memory_space<vmem>>, %arg2: memref<2x32x128xbf16, #tpu.memory_space<vmem>>, %arg3: memref<2x32x128xbf16, #tpu.memory_space<vmem>>, %arg4: memref<2x1x128xf32, #tpu.memory_space<vmem>>, %arg5: memref<32x32xbf16, #tpu.memory_space<vmem>>, %arg6: memref<1x32xf32, #tpu.memory_space<vmem>>, %arg7: memref<1x32xf32, #tpu.memory_space<vmem>>, %arg8: memref<1x1xf32, #tpu.memory_space<vmem>>, %arg9: memref<8x1x32xf32, #tpu.memory_space<vmem>>, %arg10: memref<1x32xf32, #tpu.memory_space<vmem>>) attributes {dimension_semantics = [#tpu.dimension_semantics<parallel>], iteration_bounds = array<i64: 1>, scalar_prefetch = 0 : i64, scratch_operands = 0 : i64, tpu.core_type = #tpu.core_type<tc>, window_params = [{transform_indices = @transform_0, window_bounds = array<i64: 8, 1, 32>}, {pipeline_mode = #tpu.pipeline_mode<synchronous>, transform_indices = @transform_1, window_bounds = array<i64: 2, 32, 128>}, {pipeline_mode = #tpu.pipeline_mode<synchronous>, transform_indices = @transform_2, window_bounds = array<i64: 2, 32, 128>}, {pipeline_mode = #tpu.pipeline_mode<synchronous>, transform_indices = @transform_3, window_bounds = array<i64: 2, 1, 128>}, {pipeline_mode = #tpu.pipeline_mode<synchronous>, transform_indices = @transform_4, window_bounds = array<i64: 32, 32>}, {pipeline_mode = #tpu.pipeline_mode<synchronous>, transform_indices = @transform_5, window_bounds = array<i64: 1, 32>}, {pipeline_mode = #tpu.pipeline_mode<synchronous>, transform_indices = @transform_6, window_bounds = array<i64: 1, 32>}, {pipeline_mode = #tpu.pipeline_mode<synchronous>, transform_indices = @transform_7, window_bounds = array<i64: 1, 1>}, {transform_indices = @transform_8, window_bounds = array<i64: 8, 1, 32>}, {transform_indices = @transform_9, window_bounds = array<i64: 1, 32>}]} {
    %0 = tpu.iota {dimensions = array<i32: 1>} : vector<1x128xi32>
    %c96_i32 = arith.constant 96 : i32
    %1 = vector.broadcast %c96_i32 : i32 to vector<1x128xi32>
    %2 = arith.cmpi sge, %0, %1 : vector<1x128xi32>
    %c0 = arith.constant 0 : index
    %c0_0 = arith.constant 0 : index
    %c0_1 = arith.constant 0 : index
    %3 = vector.load %arg1[%c0, %c0_0, %c0_1] : memref<8x1x32xf32, #tpu.memory_space<vmem>>, vector<8x1x32xf32>
    %c0_2 = arith.constant 0 : index
    %c0_3 = arith.constant 0 : index
    %c0_4 = arith.constant 0 : index
    %4 = vector.load %arg2[%c0_2, %c0_3, %c0_4] : memref<2x32x128xbf16, #tpu.memory_space<vmem>>, vector<1x32x128xbf16>
    %5 = vector.shape_cast %4 : vector<1x32x128xbf16> to vector<32x128xbf16>
    %c0_5 = arith.constant 0 : index
    %c0_6 = arith.constant 0 : index
    %c0_7 = arith.constant 0 : index
    %6 = vector.load %arg3[%c0_5, %c0_6, %c0_7] : memref<2x32x128xbf16, #tpu.memory_space<vmem>>, vector<1x32x128xbf16>
    %7 = vector.shape_cast %6 : vector<1x32x128xbf16> to vector<32x128xbf16>
    %c0_8 = arith.constant 0 : index
    %c0_9 = arith.constant 0 : index
    %c0_10 = arith.constant 0 : index
    %8 = vector.load %arg4[%c0_8, %c0_9, %c0_10] : memref<2x1x128xf32, #tpu.memory_space<vmem>>, vector<1x1x128xf32>
    %9 = vector.shape_cast %8 : vector<1x1x128xf32> to vector<1x128xf32>
    %10 = vector.shape_cast %3 : vector<8x1x32xf32> to vector<8x32xf32>
    %11 = arith.truncf %10 : vector<8x32xf32> to vector<8x32xbf16>
    %cst = arith.constant dense<0.000000e+00> : vector<8x128xf32>
    %12 = tpu.matmul %11, %5, %cst {dimension_numbers = #tpu.dot_dimension_numbers<[1], [0], [0], [1], [0, 0, 1, 1], [], []>} : vector<8x32xbf16>, vector<32x128xbf16>, vector<8x128xf32> -> vector<8x128xf32>
    %13 = vector.broadcast %9 : vector<1x128xf32> to vector<8x128xf32>
    %14 = arith.addf %12, %13 : vector<8x128xf32>
    %15 = vector.shape_cast %14 : vector<8x128xf32> to vector<8x1x128xf32>
    %cst_11 = arith.constant 0.000000e+00 : f32
    %16 = vector.broadcast %cst_11 : f32 to vector<1x32xf32>
    %cst_12 = arith.constant 0.000000e+00 : f32
    %17 = vector.broadcast %cst_12 : f32 to vector<1x32xf32>
    %18 = vector.extract_strided_slice %15 {offsets = [0, 0, 0], sizes = [1, 1, 128], strides = [1, 1, 1]} : vector<8x1x128xf32> to vector<1x1x128xf32>
    %19 = vector.shape_cast %18 : vector<1x1x128xf32> to vector<1x128xf32>
    %20 = arith.truncf %16 : vector<1x32xf32> to vector<1x32xbf16>
    %cst_13 = arith.constant dense<0.000000e+00> : vector<1x128xf32>
    %21 = tpu.matmul %20, %7, %cst_13 {dimension_numbers = #tpu.dot_dimension_numbers<[1], [0], [0], [1], [0, 0, 1, 1], [], []>} : vector<1x32xbf16>, vector<32x128xbf16>, vector<1x128xf32> -> vector<1x128xf32>
    %22 = arith.addf %19, %21 : vector<1x128xf32>
    %23 = math.tanh %22 : vector<1x128xf32>
    %24 = arith.negf %22 : vector<1x128xf32>
    %25 = math.exp %24 : vector<1x128xf32>
    %cst_14 = arith.constant 1.000000e+00 : f32
    %26 = vector.broadcast %cst_14 : f32 to vector<1x128xf32>
    %27 = arith.addf %26, %25 : vector<1x128xf32>
    %28 = arith.divf %26, %27 : vector<1x128xf32>
    %29 = arith.select %2, %23, %28 : vector<1x128xi1>, vector<1x128xf32>
    %c64_i32 = arith.constant 64 : i32
    %30 = tpu.dynamic_rotate %29 by %c64_i32 dim 1 : vector<1x128xf32>, i32 -> vector<1x128xf32>
    %31 = arith.mulf %29, %30 : vector<1x128xf32>
    %32 = vector.extract_strided_slice %29 {offsets = [0, 0], sizes = [1, 32], strides = [1, 1]} : vector<1x128xf32> to vector<1x32xf32>
    %33 = vector.extract_strided_slice %30 {offsets = [0, 0], sizes = [1, 32], strides = [1, 1]} : vector<1x128xf32> to vector<1x32xf32>
    %34 = vector.extract_strided_slice %31 {offsets = [0, 32], sizes = [1, 32], strides = [1, 1]} : vector<1x128xf32> to vector<1x32xf32>
    %35 = arith.mulf %32, %17 : vector<1x32xf32>
    %36 = arith.addf %35, %34 : vector<1x32xf32>
    %37 = math.tanh %36 : vector<1x32xf32>
    %38 = arith.mulf %33, %37 : vector<1x32xf32>
    %39 = vector.extract_strided_slice %15 {offsets = [1, 0, 0], sizes = [1, 1, 128], strides = [1, 1, 1]} : vector<8x1x128xf32> to vector<1x1x128xf32>
    %40 = vector.shape_cast %39 : vector<1x1x128xf32> to vector<1x128xf32>
    %41 = arith.truncf %38 : vector<1x32xf32> to vector<1x32xbf16>
    %cst_15 = arith.constant dense<0.000000e+00> : vector<1x128xf32>
    %42 = tpu.matmul %41, %7, %cst_15 {dimension_numbers = #tpu.dot_dimension_numbers<[1], [0], [0], [1], [0, 0, 1, 1], [], []>} : vector<1x32xbf16>, vector<32x128xbf16>, vector<1x128xf32> -> vector<1x128xf32>
    %43 = arith.addf %40, %42 : vector<1x128xf32>
    %44 = math.tanh %43 : vector<1x128xf32>
    %45 = arith.negf %43 : vector<1x128xf32>
    %46 = math.exp %45 : vector<1x128xf32>
    %cst_16 = arith.constant 1.000000e+00 : f32
    %47 = vector.broadcast %cst_16 : f32 to vector<1x128xf32>
    %48 = arith.addf %47, %46 : vector<1x128xf32>
    %49 = arith.divf %47, %48 : vector<1x128xf32>
    %50 = arith.select %2, %44, %49 : vector<1x128xi1>, vector<1x128xf32>
    %c64_i32_17 = arith.constant 64 : i32
    %51 = tpu.dynamic_rotate %50 by %c64_i32_17 dim 1 : vector<1x128xf32>, i32 -> vector<1x128xf32>
    %52 = arith.mulf %50, %51 : vector<1x128xf32>
    %53 = vector.extract_strided_slice %50 {offsets = [0, 0], sizes = [1, 32], strides = [1, 1]} : vector<1x128xf32> to vector<1x32xf32>
    %54 = vector.extract_strided_slice %51 {offsets = [0, 0], sizes = [1, 32], strides = [1, 1]} : vector<1x128xf32> to vector<1x32xf32>
    %55 = vector.extract_strided_slice %52 {offsets = [0, 32], sizes = [1, 32], strides = [1, 1]} : vector<1x128xf32> to vector<1x32xf32>
    %56 = arith.mulf %53, %36 : vector<1x32xf32>
    %57 = arith.addf %56, %55 : vector<1x32xf32>
    %58 = math.tanh %57 : vector<1x32xf32>
    %59 = arith.mulf %54, %58 : vector<1x32xf32>
    %60 = vector.extract_strided_slice %15 {offsets = [2, 0, 0], sizes = [1, 1, 128], strides = [1, 1, 1]} : vector<8x1x128xf32> to vector<1x1x128xf32>
    %61 = vector.shape_cast %60 : vector<1x1x128xf32> to vector<1x128xf32>
    %62 = arith.truncf %59 : vector<1x32xf32> to vector<1x32xbf16>
    %cst_18 = arith.constant dense<0.000000e+00> : vector<1x128xf32>
    %63 = tpu.matmul %62, %7, %cst_18 {dimension_numbers = #tpu.dot_dimension_numbers<[1], [0], [0], [1], [0, 0, 1, 1], [], []>} : vector<1x32xbf16>, vector<32x128xbf16>, vector<1x128xf32> -> vector<1x128xf32>
    %64 = arith.addf %61, %63 : vector<1x128xf32>
    %65 = math.tanh %64 : vector<1x128xf32>
    %66 = arith.negf %64 : vector<1x128xf32>
    %67 = math.exp %66 : vector<1x128xf32>
    %cst_19 = arith.constant 1.000000e+00 : f32
    %68 = vector.broadcast %cst_19 : f32 to vector<1x128xf32>
    %69 = arith.addf %68, %67 : vector<1x128xf32>
    %70 = arith.divf %68, %69 : vector<1x128xf32>
    %71 = arith.select %2, %65, %70 : vector<1x128xi1>, vector<1x128xf32>
    %c64_i32_20 = arith.constant 64 : i32
    %72 = tpu.dynamic_rotate %71 by %c64_i32_20 dim 1 : vector<1x128xf32>, i32 -> vector<1x128xf32>
    %73 = arith.mulf %71, %72 : vector<1x128xf32>
    %74 = vector.extract_strided_slice %71 {offsets = [0, 0], sizes = [1, 32], strides = [1, 1]} : vector<1x128xf32> to vector<1x32xf32>
    %75 = vector.extract_strided_slice %72 {offsets = [0, 0], sizes = [1, 32], strides = [1, 1]} : vector<1x128xf32> to vector<1x32xf32>
    %76 = vector.extract_strided_slice %73 {offsets = [0, 32], sizes = [1, 32], strides = [1, 1]} : vector<1x128xf32> to vector<1x32xf32>
    %77 = arith.mulf %74, %57 : vector<1x32xf32>
    %78 = arith.addf %77, %76 : vector<1x32xf32>
    %79 = math.tanh %78 : vector<1x32xf32>
    %80 = arith.mulf %75, %79 : vector<1x32xf32>
    %81 = vector.extract_strided_slice %15 {offsets = [3, 0, 0], sizes = [1, 1, 128], strides = [1, 1, 1]} : vector<8x1x128xf32> to vector<1x1x128xf32>
    %82 = vector.shape_cast %81 : vector<1x1x128xf32> to vector<1x128xf32>
    %83 = arith.truncf %80 : vector<1x32xf32> to vector<1x32xbf16>
    %cst_21 = arith.constant dense<0.000000e+00> : vector<1x128xf32>
    %84 = tpu.matmul %83, %7, %cst_21 {dimension_numbers = #tpu.dot_dimension_numbers<[1], [0], [0], [1], [0, 0, 1, 1], [], []>} : vector<1x32xbf16>, vector<32x128xbf16>, vector<1x128xf32> -> vector<1x128xf32>
    %85 = arith.addf %82, %84 : vector<1x128xf32>
    %86 = math.tanh %85 : vector<1x128xf32>
    %87 = arith.negf %85 : vector<1x128xf32>
    %88 = math.exp %87 : vector<1x128xf32>
    %cst_22 = arith.constant 1.000000e+00 : f32
    %89 = vector.broadcast %cst_22 : f32 to vector<1x128xf32>
    %90 = arith.addf %89, %88 : vector<1x128xf32>
    %91 = arith.divf %89, %90 : vector<1x128xf32>
    %92 = arith.select %2, %86, %91 : vector<1x128xi1>, vector<1x128xf32>
    %c64_i32_23 = arith.constant 64 : i32
    %93 = tpu.dynamic_rotate %92 by %c64_i32_23 dim 1 : vector<1x128xf32>, i32 -> vector<1x128xf32>
    %94 = arith.mulf %92, %93 : vector<1x128xf32>
    %95 = vector.extract_strided_slice %92 {offsets = [0, 0], sizes = [1, 32], strides = [1, 1]} : vector<1x128xf32> to vector<1x32xf32>
    %96 = vector.extract_strided_slice %93 {offsets = [0, 0], sizes = [1, 32], strides = [1, 1]} : vector<1x128xf32> to vector<1x32xf32>
    %97 = vector.extract_strided_slice %94 {offsets = [0, 32], sizes = [1, 32], strides = [1, 1]} : vector<1x128xf32> to vector<1x32xf32>
    %98 = arith.mulf %95, %78 : vector<1x32xf32>
    %99 = arith.addf %98, %97 : vector<1x32xf32>
    %100 = math.tanh %99 : vector<1x32xf32>
    %101 = arith.mulf %96, %100 : vector<1x32xf32>
    %102 = vector.extract_strided_slice %15 {offsets = [4, 0, 0], sizes = [1, 1, 128], strides = [1, 1, 1]} : vector<8x1x128xf32> to vector<1x1x128xf32>
    %103 = vector.shape_cast %102 : vector<1x1x128xf32> to vector<1x128xf32>
    %104 = arith.truncf %101 : vector<1x32xf32> to vector<1x32xbf16>
    %cst_24 = arith.constant dense<0.000000e+00> : vector<1x128xf32>
    %105 = tpu.matmul %104, %7, %cst_24 {dimension_numbers = #tpu.dot_dimension_numbers<[1], [0], [0], [1], [0, 0, 1, 1], [], []>} : vector<1x32xbf16>, vector<32x128xbf16>, vector<1x128xf32> -> vector<1x128xf32>
    %106 = arith.addf %103, %105 : vector<1x128xf32>
    %107 = math.tanh %106 : vector<1x128xf32>
    %108 = arith.negf %106 : vector<1x128xf32>
    %109 = math.exp %108 : vector<1x128xf32>
    %cst_25 = arith.constant 1.000000e+00 : f32
    %110 = vector.broadcast %cst_25 : f32 to vector<1x128xf32>
    %111 = arith.addf %110, %109 : vector<1x128xf32>
    %112 = arith.divf %110, %111 : vector<1x128xf32>
    %113 = arith.select %2, %107, %112 : vector<1x128xi1>, vector<1x128xf32>
    %c64_i32_26 = arith.constant 64 : i32
    %114 = tpu.dynamic_rotate %113 by %c64_i32_26 dim 1 : vector<1x128xf32>, i32 -> vector<1x128xf32>
    %115 = arith.mulf %113, %114 : vector<1x128xf32>
    %116 = vector.extract_strided_slice %113 {offsets = [0, 0], sizes = [1, 32], strides = [1, 1]} : vector<1x128xf32> to vector<1x32xf32>
    %117 = vector.extract_strided_slice %114 {offsets = [0, 0], sizes = [1, 32], strides = [1, 1]} : vector<1x128xf32> to vector<1x32xf32>
    %118 = vector.extract_strided_slice %115 {offsets = [0, 32], sizes = [1, 32], strides = [1, 1]} : vector<1x128xf32> to vector<1x32xf32>
    %119 = arith.mulf %116, %99 : vector<1x32xf32>
    %120 = arith.addf %119, %118 : vector<1x32xf32>
    %121 = math.tanh %120 : vector<1x32xf32>
    %122 = arith.mulf %117, %121 : vector<1x32xf32>
    %123 = vector.extract_strided_slice %15 {offsets = [5, 0, 0], sizes = [1, 1, 128], strides = [1, 1, 1]} : vector<8x1x128xf32> to vector<1x1x128xf32>
    %124 = vector.shape_cast %123 : vector<1x1x128xf32> to vector<1x128xf32>
    %125 = arith.truncf %122 : vector<1x32xf32> to vector<1x32xbf16>
    %cst_27 = arith.constant dense<0.000000e+00> : vector<1x128xf32>
    %126 = tpu.matmul %125, %7, %cst_27 {dimension_numbers = #tpu.dot_dimension_numbers<[1], [0], [0], [1], [0, 0, 1, 1], [], []>} : vector<1x32xbf16>, vector<32x128xbf16>, vector<1x128xf32> -> vector<1x128xf32>
    %127 = arith.addf %124, %126 : vector<1x128xf32>
    %128 = math.tanh %127 : vector<1x128xf32>
    %129 = arith.negf %127 : vector<1x128xf32>
    %130 = math.exp %129 : vector<1x128xf32>
    %cst_28 = arith.constant 1.000000e+00 : f32
    %131 = vector.broadcast %cst_28 : f32 to vector<1x128xf32>
    %132 = arith.addf %131, %130 : vector<1x128xf32>
    %133 = arith.divf %131, %132 : vector<1x128xf32>
    %134 = arith.select %2, %128, %133 : vector<1x128xi1>, vector<1x128xf32>
    %c64_i32_29 = arith.constant 64 : i32
    %135 = tpu.dynamic_rotate %134 by %c64_i32_29 dim 1 : vector<1x128xf32>, i32 -> vector<1x128xf32>
    %136 = arith.mulf %134, %135 : vector<1x128xf32>
    %137 = vector.extract_strided_slice %134 {offsets = [0, 0], sizes = [1, 32], strides = [1, 1]} : vector<1x128xf32> to vector<1x32xf32>
    %138 = vector.extract_strided_slice %135 {offsets = [0, 0], sizes = [1, 32], strides = [1, 1]} : vector<1x128xf32> to vector<1x32xf32>
    %139 = vector.extract_strided_slice %136 {offsets = [0, 32], sizes = [1, 32], strides = [1, 1]} : vector<1x128xf32> to vector<1x32xf32>
    %140 = arith.mulf %137, %120 : vector<1x32xf32>
    %141 = arith.addf %140, %139 : vector<1x32xf32>
    %142 = math.tanh %141 : vector<1x32xf32>
    %143 = arith.mulf %138, %142 : vector<1x32xf32>
    %144 = vector.extract_strided_slice %15 {offsets = [6, 0, 0], sizes = [1, 1, 128], strides = [1, 1, 1]} : vector<8x1x128xf32> to vector<1x1x128xf32>
    %145 = vector.shape_cast %144 : vector<1x1x128xf32> to vector<1x128xf32>
    %146 = arith.truncf %143 : vector<1x32xf32> to vector<1x32xbf16>
    %cst_30 = arith.constant dense<0.000000e+00> : vector<1x128xf32>
    %147 = tpu.matmul %146, %7, %cst_30 {dimension_numbers = #tpu.dot_dimension_numbers<[1], [0], [0], [1], [0, 0, 1, 1], [], []>} : vector<1x32xbf16>, vector<32x128xbf16>, vector<1x128xf32> -> vector<1x128xf32>
    %148 = arith.addf %145, %147 : vector<1x128xf32>
    %149 = math.tanh %148 : vector<1x128xf32>
    %150 = arith.negf %148 : vector<1x128xf32>
    %151 = math.exp %150 : vector<1x128xf32>
    %cst_31 = arith.constant 1.000000e+00 : f32
    %152 = vector.broadcast %cst_31 : f32 to vector<1x128xf32>
    %153 = arith.addf %152, %151 : vector<1x128xf32>
    %154 = arith.divf %152, %153 : vector<1x128xf32>
    %155 = arith.select %2, %149, %154 : vector<1x128xi1>, vector<1x128xf32>
    %c64_i32_32 = arith.constant 64 : i32
    %156 = tpu.dynamic_rotate %155 by %c64_i32_32 dim 1 : vector<1x128xf32>, i32 -> vector<1x128xf32>
    %157 = arith.mulf %155, %156 : vector<1x128xf32>
    %158 = vector.extract_strided_slice %155 {offsets = [0, 0], sizes = [1, 32], strides = [1, 1]} : vector<1x128xf32> to vector<1x32xf32>
    %159 = vector.extract_strided_slice %156 {offsets = [0, 0], sizes = [1, 32], strides = [1, 1]} : vector<1x128xf32> to vector<1x32xf32>
    %160 = vector.extract_strided_slice %157 {offsets = [0, 32], sizes = [1, 32], strides = [1, 1]} : vector<1x128xf32> to vector<1x32xf32>
    %161 = arith.mulf %158, %141 : vector<1x32xf32>
    %162 = arith.addf %161, %160 : vector<1x32xf32>
    %163 = math.tanh %162 : vector<1x32xf32>
    %164 = arith.mulf %159, %163 : vector<1x32xf32>
    %165 = vector.extract_strided_slice %15 {offsets = [7, 0, 0], sizes = [1, 1, 128], strides = [1, 1, 1]} : vector<8x1x128xf32> to vector<1x1x128xf32>
    %166 = vector.shape_cast %165 : vector<1x1x128xf32> to vector<1x128xf32>
    %167 = arith.truncf %164 : vector<1x32xf32> to vector<1x32xbf16>
    %cst_33 = arith.constant dense<0.000000e+00> : vector<1x128xf32>
    %168 = tpu.matmul %167, %7, %cst_33 {dimension_numbers = #tpu.dot_dimension_numbers<[1], [0], [0], [1], [0, 0, 1, 1], [], []>} : vector<1x32xbf16>, vector<32x128xbf16>, vector<1x128xf32> -> vector<1x128xf32>
    %169 = arith.addf %166, %168 : vector<1x128xf32>
    %170 = math.tanh %169 : vector<1x128xf32>
    %171 = arith.negf %169 : vector<1x128xf32>
    %172 = math.exp %171 : vector<1x128xf32>
    %cst_34 = arith.constant 1.000000e+00 : f32
    %173 = vector.broadcast %cst_34 : f32 to vector<1x128xf32>
    %174 = arith.addf %173, %172 : vector<1x128xf32>
    %175 = arith.divf %173, %174 : vector<1x128xf32>
    %176 = arith.select %2, %170, %175 : vector<1x128xi1>, vector<1x128xf32>
    %c64_i32_35 = arith.constant 64 : i32
    %177 = tpu.dynamic_rotate %176 by %c64_i32_35 dim 1 : vector<1x128xf32>, i32 -> vector<1x128xf32>
    %178 = arith.mulf %176, %177 : vector<1x128xf32>
    %179 = vector.extract_strided_slice %176 {offsets = [0, 0], sizes = [1, 32], strides = [1, 1]} : vector<1x128xf32> to vector<1x32xf32>
    %180 = vector.extract_strided_slice %177 {offsets = [0, 0], sizes = [1, 32], strides = [1, 1]} : vector<1x128xf32> to vector<1x32xf32>
    %181 = vector.extract_strided_slice %178 {offsets = [0, 32], sizes = [1, 32], strides = [1, 1]} : vector<1x128xf32> to vector<1x32xf32>
    %182 = arith.mulf %179, %162 : vector<1x32xf32>
    %183 = arith.addf %182, %181 : vector<1x32xf32>
    %184 = math.tanh %183 : vector<1x32xf32>
    %185 = arith.mulf %180, %184 : vector<1x32xf32>
    %186 = vector.shape_cast %38 : vector<1x32xf32> to vector<1x1x32xf32>
    %187 = vector.shape_cast %59 : vector<1x32xf32> to vector<1x1x32xf32>
    %188 = vector.shape_cast %80 : vector<1x32xf32> to vector<1x1x32xf32>
    %189 = vector.shape_cast %101 : vector<1x32xf32> to vector<1x1x32xf32>
    %190 = vector.shape_cast %122 : vector<1x32xf32> to vector<1x1x32xf32>
    %191 = vector.shape_cast %143 : vector<1x32xf32> to vector<1x1x32xf32>
    %192 = vector.shape_cast %164 : vector<1x32xf32> to vector<1x1x32xf32>
    %193 = vector.shape_cast %185 : vector<1x32xf32> to vector<1x1x32xf32>
    %194 = tpu.concatenate %186, %187, %188, %189, %190, %191, %192, %193 in 0 : vector<1x1x32xf32>, vector<1x1x32xf32>, vector<1x1x32xf32>, vector<1x1x32xf32>, vector<1x1x32xf32>, vector<1x1x32xf32>, vector<1x1x32xf32>, vector<1x1x32xf32> -> vector<8x1x32xf32>
    %c1 = arith.constant 1 : index
    %c0_36 = arith.constant 0 : index
    %c0_37 = arith.constant 0 : index
    %195 = vector.load %arg2[%c1, %c0_36, %c0_37] : memref<2x32x128xbf16, #tpu.memory_space<vmem>>, vector<1x32x128xbf16>
    %196 = vector.shape_cast %195 : vector<1x32x128xbf16> to vector<32x128xbf16>
    %c1_38 = arith.constant 1 : index
    %c0_39 = arith.constant 0 : index
    %c0_40 = arith.constant 0 : index
    %197 = vector.load %arg3[%c1_38, %c0_39, %c0_40] : memref<2x32x128xbf16, #tpu.memory_space<vmem>>, vector<1x32x128xbf16>
    %198 = vector.shape_cast %197 : vector<1x32x128xbf16> to vector<32x128xbf16>
    %c1_41 = arith.constant 1 : index
    %c0_42 = arith.constant 0 : index
    %c0_43 = arith.constant 0 : index
    %199 = vector.load %arg4[%c1_41, %c0_42, %c0_43] : memref<2x1x128xf32, #tpu.memory_space<vmem>>, vector<1x1x128xf32>
    %200 = vector.shape_cast %199 : vector<1x1x128xf32> to vector<1x128xf32>
    %201 = vector.shape_cast %194 : vector<8x1x32xf32> to vector<8x32xf32>
    %202 = arith.truncf %201 : vector<8x32xf32> to vector<8x32xbf16>
    %cst_44 = arith.constant dense<0.000000e+00> : vector<8x128xf32>
    %203 = tpu.matmul %202, %196, %cst_44 {dimension_numbers = #tpu.dot_dimension_numbers<[1], [0], [0], [1], [0, 0, 1, 1], [], []>} : vector<8x32xbf16>, vector<32x128xbf16>, vector<8x128xf32> -> vector<8x128xf32>
    %204 = vector.broadcast %200 : vector<1x128xf32> to vector<8x128xf32>
    %205 = arith.addf %203, %204 : vector<8x128xf32>
    %206 = vector.shape_cast %205 : vector<8x128xf32> to vector<8x1x128xf32>
    %cst_45 = arith.constant 0.000000e+00 : f32
    %207 = vector.broadcast %cst_45 : f32 to vector<1x32xf32>
    %cst_46 = arith.constant 0.000000e+00 : f32
    %208 = vector.broadcast %cst_46 : f32 to vector<1x32xf32>
    %209 = vector.extract_strided_slice %206 {offsets = [0, 0, 0], sizes = [1, 1, 128], strides = [1, 1, 1]} : vector<8x1x128xf32> to vector<1x1x128xf32>
    %210 = vector.shape_cast %209 : vector<1x1x128xf32> to vector<1x128xf32>
    %211 = arith.truncf %207 : vector<1x32xf32> to vector<1x32xbf16>
    %cst_47 = arith.constant dense<0.000000e+00> : vector<1x128xf32>
    %212 = tpu.matmul %211, %198, %cst_47 {dimension_numbers = #tpu.dot_dimension_numbers<[1], [0], [0], [1], [0, 0, 1, 1], [], []>} : vector<1x32xbf16>, vector<32x128xbf16>, vector<1x128xf32> -> vector<1x128xf32>
    %213 = arith.addf %210, %212 : vector<1x128xf32>
    %214 = math.tanh %213 : vector<1x128xf32>
    %215 = arith.negf %213 : vector<1x128xf32>
    %216 = math.exp %215 : vector<1x128xf32>
    %cst_48 = arith.constant 1.000000e+00 : f32
    %217 = vector.broadcast %cst_48 : f32 to vector<1x128xf32>
    %218 = arith.addf %217, %216 : vector<1x128xf32>
    %219 = arith.divf %217, %218 : vector<1x128xf32>
    %220 = arith.select %2, %214, %219 : vector<1x128xi1>, vector<1x128xf32>
    %c64_i32_49 = arith.constant 64 : i32
    %221 = tpu.dynamic_rotate %220 by %c64_i32_49 dim 1 : vector<1x128xf32>, i32 -> vector<1x128xf32>
    %222 = arith.mulf %220, %221 : vector<1x128xf32>
    %223 = vector.extract_strided_slice %220 {offsets = [0, 0], sizes = [1, 32], strides = [1, 1]} : vector<1x128xf32> to vector<1x32xf32>
    %224 = vector.extract_strided_slice %221 {offsets = [0, 0], sizes = [1, 32], strides = [1, 1]} : vector<1x128xf32> to vector<1x32xf32>
    %225 = vector.extract_strided_slice %222 {offsets = [0, 32], sizes = [1, 32], strides = [1, 1]} : vector<1x128xf32> to vector<1x32xf32>
    %226 = arith.mulf %223, %208 : vector<1x32xf32>
    %227 = arith.addf %226, %225 : vector<1x32xf32>
    %228 = math.tanh %227 : vector<1x32xf32>
    %229 = arith.mulf %224, %228 : vector<1x32xf32>
    %230 = vector.extract_strided_slice %206 {offsets = [1, 0, 0], sizes = [1, 1, 128], strides = [1, 1, 1]} : vector<8x1x128xf32> to vector<1x1x128xf32>
    %231 = vector.shape_cast %230 : vector<1x1x128xf32> to vector<1x128xf32>
    %232 = arith.truncf %229 : vector<1x32xf32> to vector<1x32xbf16>
    %cst_50 = arith.constant dense<0.000000e+00> : vector<1x128xf32>
    %233 = tpu.matmul %232, %198, %cst_50 {dimension_numbers = #tpu.dot_dimension_numbers<[1], [0], [0], [1], [0, 0, 1, 1], [], []>} : vector<1x32xbf16>, vector<32x128xbf16>, vector<1x128xf32> -> vector<1x128xf32>
    %234 = arith.addf %231, %233 : vector<1x128xf32>
    %235 = math.tanh %234 : vector<1x128xf32>
    %236 = arith.negf %234 : vector<1x128xf32>
    %237 = math.exp %236 : vector<1x128xf32>
    %cst_51 = arith.constant 1.000000e+00 : f32
    %238 = vector.broadcast %cst_51 : f32 to vector<1x128xf32>
    %239 = arith.addf %238, %237 : vector<1x128xf32>
    %240 = arith.divf %238, %239 : vector<1x128xf32>
    %241 = arith.select %2, %235, %240 : vector<1x128xi1>, vector<1x128xf32>
    %c64_i32_52 = arith.constant 64 : i32
    %242 = tpu.dynamic_rotate %241 by %c64_i32_52 dim 1 : vector<1x128xf32>, i32 -> vector<1x128xf32>
    %243 = arith.mulf %241, %242 : vector<1x128xf32>
    %244 = vector.extract_strided_slice %241 {offsets = [0, 0], sizes = [1, 32], strides = [1, 1]} : vector<1x128xf32> to vector<1x32xf32>
    %245 = vector.extract_strided_slice %242 {offsets = [0, 0], sizes = [1, 32], strides = [1, 1]} : vector<1x128xf32> to vector<1x32xf32>
    %246 = vector.extract_strided_slice %243 {offsets = [0, 32], sizes = [1, 32], strides = [1, 1]} : vector<1x128xf32> to vector<1x32xf32>
    %247 = arith.mulf %244, %227 : vector<1x32xf32>
    %248 = arith.addf %247, %246 : vector<1x32xf32>
    %249 = math.tanh %248 : vector<1x32xf32>
    %250 = arith.mulf %245, %249 : vector<1x32xf32>
    %251 = vector.extract_strided_slice %206 {offsets = [2, 0, 0], sizes = [1, 1, 128], strides = [1, 1, 1]} : vector<8x1x128xf32> to vector<1x1x128xf32>
    %252 = vector.shape_cast %251 : vector<1x1x128xf32> to vector<1x128xf32>
    %253 = arith.truncf %250 : vector<1x32xf32> to vector<1x32xbf16>
    %cst_53 = arith.constant dense<0.000000e+00> : vector<1x128xf32>
    %254 = tpu.matmul %253, %198, %cst_53 {dimension_numbers = #tpu.dot_dimension_numbers<[1], [0], [0], [1], [0, 0, 1, 1], [], []>} : vector<1x32xbf16>, vector<32x128xbf16>, vector<1x128xf32> -> vector<1x128xf32>
    %255 = arith.addf %252, %254 : vector<1x128xf32>
    %256 = math.tanh %255 : vector<1x128xf32>
    %257 = arith.negf %255 : vector<1x128xf32>
    %258 = math.exp %257 : vector<1x128xf32>
    %cst_54 = arith.constant 1.000000e+00 : f32
    %259 = vector.broadcast %cst_54 : f32 to vector<1x128xf32>
    %260 = arith.addf %259, %258 : vector<1x128xf32>
    %261 = arith.divf %259, %260 : vector<1x128xf32>
    %262 = arith.select %2, %256, %261 : vector<1x128xi1>, vector<1x128xf32>
    %c64_i32_55 = arith.constant 64 : i32
    %263 = tpu.dynamic_rotate %262 by %c64_i32_55 dim 1 : vector<1x128xf32>, i32 -> vector<1x128xf32>
    %264 = arith.mulf %262, %263 : vector<1x128xf32>
    %265 = vector.extract_strided_slice %262 {offsets = [0, 0], sizes = [1, 32], strides = [1, 1]} : vector<1x128xf32> to vector<1x32xf32>
    %266 = vector.extract_strided_slice %263 {offsets = [0, 0], sizes = [1, 32], strides = [1, 1]} : vector<1x128xf32> to vector<1x32xf32>
    %267 = vector.extract_strided_slice %264 {offsets = [0, 32], sizes = [1, 32], strides = [1, 1]} : vector<1x128xf32> to vector<1x32xf32>
    %268 = arith.mulf %265, %248 : vector<1x32xf32>
    %269 = arith.addf %268, %267 : vector<1x32xf32>
    %270 = math.tanh %269 : vector<1x32xf32>
    %271 = arith.mulf %266, %270 : vector<1x32xf32>
    %272 = vector.extract_strided_slice %206 {offsets = [3, 0, 0], sizes = [1, 1, 128], strides = [1, 1, 1]} : vector<8x1x128xf32> to vector<1x1x128xf32>
    %273 = vector.shape_cast %272 : vector<1x1x128xf32> to vector<1x128xf32>
    %274 = arith.truncf %271 : vector<1x32xf32> to vector<1x32xbf16>
    %cst_56 = arith.constant dense<0.000000e+00> : vector<1x128xf32>
    %275 = tpu.matmul %274, %198, %cst_56 {dimension_numbers = #tpu.dot_dimension_numbers<[1], [0], [0], [1], [0, 0, 1, 1], [], []>} : vector<1x32xbf16>, vector<32x128xbf16>, vector<1x128xf32> -> vector<1x128xf32>
    %276 = arith.addf %273, %275 : vector<1x128xf32>
    %277 = math.tanh %276 : vector<1x128xf32>
    %278 = arith.negf %276 : vector<1x128xf32>
    %279 = math.exp %278 : vector<1x128xf32>
    %cst_57 = arith.constant 1.000000e+00 : f32
    %280 = vector.broadcast %cst_57 : f32 to vector<1x128xf32>
    %281 = arith.addf %280, %279 : vector<1x128xf32>
    %282 = arith.divf %280, %281 : vector<1x128xf32>
    %283 = arith.select %2, %277, %282 : vector<1x128xi1>, vector<1x128xf32>
    %c64_i32_58 = arith.constant 64 : i32
    %284 = tpu.dynamic_rotate %283 by %c64_i32_58 dim 1 : vector<1x128xf32>, i32 -> vector<1x128xf32>
    %285 = arith.mulf %283, %284 : vector<1x128xf32>
    %286 = vector.extract_strided_slice %283 {offsets = [0, 0], sizes = [1, 32], strides = [1, 1]} : vector<1x128xf32> to vector<1x32xf32>
    %287 = vector.extract_strided_slice %284 {offsets = [0, 0], sizes = [1, 32], strides = [1, 1]} : vector<1x128xf32> to vector<1x32xf32>
    %288 = vector.extract_strided_slice %285 {offsets = [0, 32], sizes = [1, 32], strides = [1, 1]} : vector<1x128xf32> to vector<1x32xf32>
    %289 = arith.mulf %286, %269 : vector<1x32xf32>
    %290 = arith.addf %289, %288 : vector<1x32xf32>
    %291 = math.tanh %290 : vector<1x32xf32>
    %292 = arith.mulf %287, %291 : vector<1x32xf32>
    %293 = vector.extract_strided_slice %206 {offsets = [4, 0, 0], sizes = [1, 1, 128], strides = [1, 1, 1]} : vector<8x1x128xf32> to vector<1x1x128xf32>
    %294 = vector.shape_cast %293 : vector<1x1x128xf32> to vector<1x128xf32>
    %295 = arith.truncf %292 : vector<1x32xf32> to vector<1x32xbf16>
    %cst_59 = arith.constant dense<0.000000e+00> : vector<1x128xf32>
    %296 = tpu.matmul %295, %198, %cst_59 {dimension_numbers = #tpu.dot_dimension_numbers<[1], [0], [0], [1], [0, 0, 1, 1], [], []>} : vector<1x32xbf16>, vector<32x128xbf16>, vector<1x128xf32> -> vector<1x128xf32>
    %297 = arith.addf %294, %296 : vector<1x128xf32>
    %298 = math.tanh %297 : vector<1x128xf32>
    %299 = arith.negf %297 : vector<1x128xf32>
    %300 = math.exp %299 : vector<1x128xf32>
    %cst_60 = arith.constant 1.000000e+00 : f32
    %301 = vector.broadcast %cst_60 : f32 to vector<1x128xf32>
    %302 = arith.addf %301, %300 : vector<1x128xf32>
    %303 = arith.divf %301, %302 : vector<1x128xf32>
    %304 = arith.select %2, %298, %303 : vector<1x128xi1>, vector<1x128xf32>
    %c64_i32_61 = arith.constant 64 : i32
    %305 = tpu.dynamic_rotate %304 by %c64_i32_61 dim 1 : vector<1x128xf32>, i32 -> vector<1x128xf32>
    %306 = arith.mulf %304, %305 : vector<1x128xf32>
    %307 = vector.extract_strided_slice %304 {offsets = [0, 0], sizes = [1, 32], strides = [1, 1]} : vector<1x128xf32> to vector<1x32xf32>
    %308 = vector.extract_strided_slice %305 {offsets = [0, 0], sizes = [1, 32], strides = [1, 1]} : vector<1x128xf32> to vector<1x32xf32>
    %309 = vector.extract_strided_slice %306 {offsets = [0, 32], sizes = [1, 32], strides = [1, 1]} : vector<1x128xf32> to vector<1x32xf32>
    %310 = arith.mulf %307, %290 : vector<1x32xf32>
    %311 = arith.addf %310, %309 : vector<1x32xf32>
    %312 = math.tanh %311 : vector<1x32xf32>
    %313 = arith.mulf %308, %312 : vector<1x32xf32>
    %314 = vector.extract_strided_slice %206 {offsets = [5, 0, 0], sizes = [1, 1, 128], strides = [1, 1, 1]} : vector<8x1x128xf32> to vector<1x1x128xf32>
    %315 = vector.shape_cast %314 : vector<1x1x128xf32> to vector<1x128xf32>
    %316 = arith.truncf %313 : vector<1x32xf32> to vector<1x32xbf16>
    %cst_62 = arith.constant dense<0.000000e+00> : vector<1x128xf32>
    %317 = tpu.matmul %316, %198, %cst_62 {dimension_numbers = #tpu.dot_dimension_numbers<[1], [0], [0], [1], [0, 0, 1, 1], [], []>} : vector<1x32xbf16>, vector<32x128xbf16>, vector<1x128xf32> -> vector<1x128xf32>
    %318 = arith.addf %315, %317 : vector<1x128xf32>
    %319 = math.tanh %318 : vector<1x128xf32>
    %320 = arith.negf %318 : vector<1x128xf32>
    %321 = math.exp %320 : vector<1x128xf32>
    %cst_63 = arith.constant 1.000000e+00 : f32
    %322 = vector.broadcast %cst_63 : f32 to vector<1x128xf32>
    %323 = arith.addf %322, %321 : vector<1x128xf32>
    %324 = arith.divf %322, %323 : vector<1x128xf32>
    %325 = arith.select %2, %319, %324 : vector<1x128xi1>, vector<1x128xf32>
    %c64_i32_64 = arith.constant 64 : i32
    %326 = tpu.dynamic_rotate %325 by %c64_i32_64 dim 1 : vector<1x128xf32>, i32 -> vector<1x128xf32>
    %327 = arith.mulf %325, %326 : vector<1x128xf32>
    %328 = vector.extract_strided_slice %325 {offsets = [0, 0], sizes = [1, 32], strides = [1, 1]} : vector<1x128xf32> to vector<1x32xf32>
    %329 = vector.extract_strided_slice %326 {offsets = [0, 0], sizes = [1, 32], strides = [1, 1]} : vector<1x128xf32> to vector<1x32xf32>
    %330 = vector.extract_strided_slice %327 {offsets = [0, 32], sizes = [1, 32], strides = [1, 1]} : vector<1x128xf32> to vector<1x32xf32>
    %331 = arith.mulf %328, %311 : vector<1x32xf32>
    %332 = arith.addf %331, %330 : vector<1x32xf32>
    %333 = math.tanh %332 : vector<1x32xf32>
    %334 = arith.mulf %329, %333 : vector<1x32xf32>
    %335 = vector.extract_strided_slice %206 {offsets = [6, 0, 0], sizes = [1, 1, 128], strides = [1, 1, 1]} : vector<8x1x128xf32> to vector<1x1x128xf32>
    %336 = vector.shape_cast %335 : vector<1x1x128xf32> to vector<1x128xf32>
    %337 = arith.truncf %334 : vector<1x32xf32> to vector<1x32xbf16>
    %cst_65 = arith.constant dense<0.000000e+00> : vector<1x128xf32>
    %338 = tpu.matmul %337, %198, %cst_65 {dimension_numbers = #tpu.dot_dimension_numbers<[1], [0], [0], [1], [0, 0, 1, 1], [], []>} : vector<1x32xbf16>, vector<32x128xbf16>, vector<1x128xf32> -> vector<1x128xf32>
    %339 = arith.addf %336, %338 : vector<1x128xf32>
    %340 = math.tanh %339 : vector<1x128xf32>
    %341 = arith.negf %339 : vector<1x128xf32>
    %342 = math.exp %341 : vector<1x128xf32>
    %cst_66 = arith.constant 1.000000e+00 : f32
    %343 = vector.broadcast %cst_66 : f32 to vector<1x128xf32>
    %344 = arith.addf %343, %342 : vector<1x128xf32>
    %345 = arith.divf %343, %344 : vector<1x128xf32>
    %346 = arith.select %2, %340, %345 : vector<1x128xi1>, vector<1x128xf32>
    %c64_i32_67 = arith.constant 64 : i32
    %347 = tpu.dynamic_rotate %346 by %c64_i32_67 dim 1 : vector<1x128xf32>, i32 -> vector<1x128xf32>
    %348 = arith.mulf %346, %347 : vector<1x128xf32>
    %349 = vector.extract_strided_slice %346 {offsets = [0, 0], sizes = [1, 32], strides = [1, 1]} : vector<1x128xf32> to vector<1x32xf32>
    %350 = vector.extract_strided_slice %347 {offsets = [0, 0], sizes = [1, 32], strides = [1, 1]} : vector<1x128xf32> to vector<1x32xf32>
    %351 = vector.extract_strided_slice %348 {offsets = [0, 32], sizes = [1, 32], strides = [1, 1]} : vector<1x128xf32> to vector<1x32xf32>
    %352 = arith.mulf %349, %332 : vector<1x32xf32>
    %353 = arith.addf %352, %351 : vector<1x32xf32>
    %354 = math.tanh %353 : vector<1x32xf32>
    %355 = arith.mulf %350, %354 : vector<1x32xf32>
    %356 = vector.extract_strided_slice %206 {offsets = [7, 0, 0], sizes = [1, 1, 128], strides = [1, 1, 1]} : vector<8x1x128xf32> to vector<1x1x128xf32>
    %357 = vector.shape_cast %356 : vector<1x1x128xf32> to vector<1x128xf32>
    %358 = arith.truncf %355 : vector<1x32xf32> to vector<1x32xbf16>
    %cst_68 = arith.constant dense<0.000000e+00> : vector<1x128xf32>
    %359 = tpu.matmul %358, %198, %cst_68 {dimension_numbers = #tpu.dot_dimension_numbers<[1], [0], [0], [1], [0, 0, 1, 1], [], []>} : vector<1x32xbf16>, vector<32x128xbf16>, vector<1x128xf32> -> vector<1x128xf32>
    %360 = arith.addf %357, %359 : vector<1x128xf32>
    %361 = math.tanh %360 : vector<1x128xf32>
    %362 = arith.negf %360 : vector<1x128xf32>
    %363 = math.exp %362 : vector<1x128xf32>
    %cst_69 = arith.constant 1.000000e+00 : f32
    %364 = vector.broadcast %cst_69 : f32 to vector<1x128xf32>
    %365 = arith.addf %364, %363 : vector<1x128xf32>
    %366 = arith.divf %364, %365 : vector<1x128xf32>
    %367 = arith.select %2, %361, %366 : vector<1x128xi1>, vector<1x128xf32>
    %c64_i32_70 = arith.constant 64 : i32
    %368 = tpu.dynamic_rotate %367 by %c64_i32_70 dim 1 : vector<1x128xf32>, i32 -> vector<1x128xf32>
    %369 = arith.mulf %367, %368 : vector<1x128xf32>
    %370 = vector.extract_strided_slice %367 {offsets = [0, 0], sizes = [1, 32], strides = [1, 1]} : vector<1x128xf32> to vector<1x32xf32>
    %371 = vector.extract_strided_slice %368 {offsets = [0, 0], sizes = [1, 32], strides = [1, 1]} : vector<1x128xf32> to vector<1x32xf32>
    %372 = vector.extract_strided_slice %369 {offsets = [0, 32], sizes = [1, 32], strides = [1, 1]} : vector<1x128xf32> to vector<1x32xf32>
    %373 = arith.mulf %370, %353 : vector<1x32xf32>
    %374 = arith.addf %373, %372 : vector<1x32xf32>
    %375 = math.tanh %374 : vector<1x32xf32>
    %376 = arith.mulf %371, %375 : vector<1x32xf32>
    %377 = vector.shape_cast %229 : vector<1x32xf32> to vector<1x1x32xf32>
    %378 = vector.shape_cast %250 : vector<1x32xf32> to vector<1x1x32xf32>
    %379 = vector.shape_cast %271 : vector<1x32xf32> to vector<1x1x32xf32>
    %380 = vector.shape_cast %292 : vector<1x32xf32> to vector<1x1x32xf32>
    %381 = vector.shape_cast %313 : vector<1x32xf32> to vector<1x1x32xf32>
    %382 = vector.shape_cast %334 : vector<1x32xf32> to vector<1x1x32xf32>
    %383 = vector.shape_cast %355 : vector<1x32xf32> to vector<1x1x32xf32>
    %384 = vector.shape_cast %376 : vector<1x32xf32> to vector<1x1x32xf32>
    %385 = tpu.concatenate %377, %378, %379, %380, %381, %382, %383, %384 in 0 : vector<1x1x32xf32>, vector<1x1x32xf32>, vector<1x1x32xf32>, vector<1x1x32xf32>, vector<1x1x32xf32>, vector<1x1x32xf32>, vector<1x1x32xf32>, vector<1x1x32xf32> -> vector<8x1x32xf32>
    %c0_71 = arith.constant 0 : index
    %c0_72 = arith.constant 0 : index
    %c0_73 = arith.constant 0 : index
    %386 = vector.load %arg9[%c0_71, %c0_72, %c0_73] : memref<8x1x32xf32, #tpu.memory_space<vmem>>, vector<8x1x32xf32>
    tpu.vector_store %arg9[%c0_71, %c0_72, %c0_73], %385 {strides = array<i32>} : memref<8x1x32xf32, #tpu.memory_space<vmem>>, vector<8x1x32xf32>,
    %387 = vector.shape_cast %385 : vector<8x1x32xf32> to vector<8x32xf32>
    %388 = arith.truncf %387 : vector<8x32xf32> to vector<8x32xbf16>
    %c0_74 = arith.constant 0 : index
    %c0_75 = arith.constant 0 : index
    %389 = vector.load %arg5[%c0_74, %c0_75] : memref<32x32xbf16, #tpu.memory_space<vmem>>, vector<32x32xbf16>
    %cst_76 = arith.constant dense<0.000000e+00> : vector<8x32xf32>
    %390 = tpu.matmul %388, %389, %cst_76 {dimension_numbers = #tpu.dot_dimension_numbers<[1], [0], [0], [1], [0, 0, 1, 1], [], []>} : vector<8x32xbf16>, vector<32x32xbf16>, vector<8x32xf32> -> vector<8x32xf32>
    %c0_77 = arith.constant 0 : index
    %c0_78 = arith.constant 0 : index
    %391 = vector.load %arg6[%c0_77, %c0_78] : memref<1x32xf32, #tpu.memory_space<vmem>>, vector<1x32xf32>
    %392 = vector.broadcast %391 : vector<1x32xf32> to vector<8x32xf32>
    %393 = arith.addf %390, %392 : vector<8x32xf32>
    %394 = math.tanh %393 : vector<8x32xf32>
    %395 = vector.shape_cast %394 : vector<8x32xf32> to vector<8x1x32xf32>
    %c0_79 = arith.constant 0 : index
    %c0_80 = arith.constant 0 : index
    %396 = vector.load %arg7[%c0_79, %c0_80] : memref<1x32xf32, #tpu.memory_space<vmem>>, vector<1x32xf32>
    %397 = vector.shape_cast %396 : vector<1x32xf32> to vector<1x1x32xf32>
    %398 = vector.broadcast %397 : vector<1x1x32xf32> to vector<8x1x32xf32>
    %399 = arith.mulf %395, %398 : vector<8x1x32xf32>
    %cst_81 = arith.constant dense<0.000000e+00> : vector<8x1xf32>
    %400 = vector.multi_reduction <add>, %399, %cst_81 [2] : vector<8x1x32xf32> to vector<8x1xf32>
    %401 = vector.shape_cast %400 : vector<8x1xf32> to vector<8x1x1xf32>
    %c0_82 = arith.constant 0 : index
    %c0_83 = arith.constant 0 : index
    %402 = vector.load %arg8[%c0_82, %c0_83] : memref<1x1xf32, #tpu.memory_space<vmem>>, vector<1x1xf32>
    %403 = vector.shape_cast %402 : vector<1x1xf32> to vector<1x1x1xf32>
    %404 = vector.broadcast %403 : vector<1x1x1xf32> to vector<8x1x1xf32>
    %405 = arith.addf %401, %404 : vector<8x1x1xf32>
    %cst_84 = arith.constant dense<0xFF800000> : vector<1x1xf32>
    %406 = vector.multi_reduction <maximumf>, %405, %cst_84 [0] : vector<8x1x1xf32> to vector<1x1xf32>
    %407 = vector.shape_cast %406 : vector<1x1xf32> to vector<1x1x1xf32>
    %408 = vector.broadcast %407 : vector<1x1x1xf32> to vector<8x1x1xf32>
    %409 = arith.subf %405, %408 : vector<8x1x1xf32>
    %410 = math.exp %409 : vector<8x1x1xf32>
    %cst_85 = arith.constant dense<0.000000e+00> : vector<1x1xf32>
    %411 = vector.multi_reduction <add>, %410, %cst_85 [0] : vector<8x1x1xf32> to vector<1x1xf32>
    %412 = vector.shape_cast %411 : vector<1x1xf32> to vector<1x1x1xf32>
    %413 = vector.broadcast %412 : vector<1x1x1xf32> to vector<8x1x1xf32>
    %414 = arith.divf %410, %413 : vector<8x1x1xf32>
    %415 = vector.broadcast %414 : vector<8x1x1xf32> to vector<8x1x32xf32>
    %416 = arith.mulf %385, %415 : vector<8x1x32xf32>
    %cst_86 = arith.constant dense<0.000000e+00> : vector<1x32xf32>
    %417 = vector.multi_reduction <add>, %416, %cst_86 [0] : vector<8x1x32xf32> to vector<1x32xf32>
    %c0_87 = arith.constant 0 : index
    %c0_88 = arith.constant 0 : index
    %418 = vector.load %arg10[%c0_87, %c0_88] : memref<1x32xf32, #tpu.memory_space<vmem>>, vector<1x32xf32>
    tpu.vector_store %arg10[%c0_87, %c0_88], %417 {strides = array<i32>} : memref<1x32xf32, #tpu.memory_space<vmem>>, vector<1x32xf32>,
    return
  }
  func.func @transform_0(%arg0: i32) -> (i32, i32, i32) {
    %c0_i32 = arith.constant 0 : i32
    %c0_i32_0 = arith.constant 0 : i32
    %c0_i32_1 = arith.constant 0 : i32
    return %c0_i32, %arg0, %c0_i32_0 : i32, i32, i32
  }
  func.func @transform_1(%arg0: i32) -> (i32, i32, i32) {
    %c0_i32 = arith.constant 0 : i32
    %c0_i32_0 = arith.constant 0 : i32
    %c0_i32_1 = arith.constant 0 : i32
    %c0_i32_2 = arith.constant 0 : i32
    return %c0_i32, %c0_i32_0, %c0_i32_1 : i32, i32, i32
  }
  func.func @transform_2(%arg0: i32) -> (i32, i32, i32) {
    %c0_i32 = arith.constant 0 : i32
    %c0_i32_0 = arith.constant 0 : i32
    %c0_i32_1 = arith.constant 0 : i32
    %c0_i32_2 = arith.constant 0 : i32
    return %c0_i32, %c0_i32_0, %c0_i32_1 : i32, i32, i32
  }
  func.func @transform_3(%arg0: i32) -> (i32, i32, i32) {
    %c0_i32 = arith.constant 0 : i32
    %c0_i32_0 = arith.constant 0 : i32
    %c0_i32_1 = arith.constant 0 : i32
    %c0_i32_2 = arith.constant 0 : i32
    return %c0_i32, %c0_i32_0, %c0_i32_1 : i32, i32, i32
  }
  func.func @transform_4(%arg0: i32) -> (i32, i32) {
    %c0_i32 = arith.constant 0 : i32
    %c0_i32_0 = arith.constant 0 : i32
    %c0_i32_1 = arith.constant 0 : i32
    return %c0_i32, %c0_i32_0 : i32, i32
  }
  func.func @transform_5(%arg0: i32) -> (i32, i32) {
    %c0_i32 = arith.constant 0 : i32
    %c0_i32_0 = arith.constant 0 : i32
    %c0_i32_1 = arith.constant 0 : i32
    return %c0_i32, %c0_i32_0 : i32, i32
  }
  func.func @transform_6(%arg0: i32) -> (i32, i32) {
    %c0_i32 = arith.constant 0 : i32
    %c0_i32_0 = arith.constant 0 : i32
    %c0_i32_1 = arith.constant 0 : i32
    return %c0_i32, %c0_i32_0 : i32, i32
  }
  func.func @transform_7(%arg0: i32) -> (i32, i32) {
    %c0_i32 = arith.constant 0 : i32
    %c0_i32_0 = arith.constant 0 : i32
    %c0_i32_1 = arith.constant 0 : i32
    return %c0_i32, %c0_i32_0 : i32, i32
  }
  func.func @transform_8(%arg0: i32) -> (i32, i32, i32) {
    %c0_i32 = arith.constant 0 : i32
    %c0_i32_0 = arith.constant 0 : i32
    %c0_i32_1 = arith.constant 0 : i32
    return %c0_i32, %arg0, %c0_i32_0 : i32, i32, i32
  }
  func.func @transform_9(%arg0: i32) -> (i32, i32) {
    %c0_i32 = arith.constant 0 : i32
    %c0_i32_0 = arith.constant 0 : i32
    return %arg0, %c0_i32 : i32, i32
  }
}

</mosaic_0001>

<llo_original>
// kernel: tpu_custom_call.1
$region0: #{tpu_custom_call.1}
  #allocation0 [shape = 'u32[]', space=smem, size = 0x4, offset = 0x4, fixed_abs, tag = 'smem constant byte address 0x4 - core index']
  #allocation1 [shape = 'u32[144,128]{1,0:T(1,128)}', space=vmem, size = 0x12000, scoped, tag = 'internal scratch']
  #allocation2 [shape = 'f32[1,1]{1,0:T(1,128)S(1)}', space=vmem, size = 0x200, scoped, tag = 'scoped memory for tpu_custom_call.1']
  %s0 = inlined_call_operand.hbm [shape: f32[8,1,32], index: 0, kind: input, shape index: {}]
  %s1 = inlined_call_operand.hbm [shape: bf16[2,32,128], index: 1, kind: input, shape index: {}]
  %s2 = inlined_call_operand.hbm [shape: bf16[2,32,128], index: 2, kind: input, shape index: {}]
  %s3 = inlined_call_operand.vmem [shape: f32[2,1,128], index: 3, kind: input, shape index: {}]
  %s4 = inlined_call_operand.vmem [shape: bf16[32,32], index: 4, kind: input, shape index: {}]
  %s5 = inlined_call_operand.vmem [shape: f32[1,32], index: 5, kind: input, shape index: {}]
  %s6 = inlined_call_operand.vmem [shape: f32[1,32], index: 6, kind: input, shape index: {}]
  %s7 = inlined_call_operand.<no memory space> [shape: f32[1,1], index: 7, kind: input, shape index: {}]
  %s8 = inlined_call_operand.hbm [shape: f32[8,1,32], index: 8, kind: output, shape index: {0}]
  %s9 = inlined_call_operand.hbm [shape: f32[1,32], index: 9, kind: output, shape index: {1}]
  %10 = xla_tuple %s8, %s9
  %s11 = sld [smem:[#allocation0]]
  $region62: #{tpu_custom_call.1} parent=0
    _
  %s13 = ssub.s32 1, %s11
  %s14 = scalar_select 0, %s13, %s11
  %v15 = vstv %s7
  %16 = vst [vmem:[#allocation2] sm:$0x1] %v15
  $region1: #{tpu_custom_call.1} parent=0
    #allocation3 [shape = 'u8[4096]{0}', space=vmem, size = 0x1000, scoped, tag = 'input window, operand 0, single buffered']
    #allocation4 [shape = 's32[1]{0}', space=sflag, size = 0x4, scoped, tag = 'scoped memory for tpu_custom_call.1']
    #allocation5 [shape = 's32[1]{0}', space=sflag, size = 0x4, scoped, tag = 'scoped memory for tpu_custom_call.1']
    #allocation6 [shape = 'u8[16384]{0}', space=vmem, size = 0x4000, scoped, tag = 'input window, operand 1, single buffered']
    #allocation7 [shape = 's32[1]{0}', space=sflag, size = 0x4, scoped, tag = 'scoped memory for tpu_custom_call.1']
    #allocation8 [shape = 'u8[16384]{0}', space=vmem, size = 0x4000, scoped, tag = 'input window, operand 2, single buffered']
    #allocation9 [shape = 'u8[4096]{0}', space=vmem, size = 0x1000, scoped, tag = 'output window, operand 0, single buffered']
    #allocation10 [shape = 'u8[512]{0}', space=vmem, size = 0x400, scoped, tag = 'output window, operand 1, single buffered']
    #allocation11 [shape = 's32[1]{0}', space=sflag, size = 0x4, scoped, tag = 'scoped memory for tpu_custom_call.1']
    %17 = vsyncpa [#allocation4], 0
    %18 = vsyncpa [#allocation7], 0
    %19 = vsyncpa [#allocation5], 0
    %20 = vsyncpa [#allocation11], 0
    // Predicated region
    $region2: #{tpu_custom_call.1} parent=1 // pred_check
      _
    $region3: #{tpu_custom_call.1} parent=1 // pred_check_branch
      %22 = sbr.rel (0) target = $region5
    $region4: #{tpu_custom_call.1} parent=1 // pred_region
      %s24 = ssub.s32 128, 128
      %25 = vsyncadd [#allocation4], %s24
      %s26 = sshll.u32 [#allocation3], 4
      %s27 = int_to_ptr.vmem [resolvable:$true] %s26
      %32 = dma.hbm_to_vmem [thread:$0]  %s0, 128, %s27, [#allocation4], 16, 16, 1
    $region5: #{tpu_custom_call.1} parent=1 // pred_fallthru
      _
    // Predicated region
    $region6: #{tpu_custom_call.1} parent=1 // pred_check
      _
    $region7: #{tpu_custom_call.1} parent=1 // pred_check_branch
      %34 = sbr.rel (0) target = $region9
    $region8: #{tpu_custom_call.1} parent=1 // pred_region
      %s36 = ssub.s32 512, 512
      %37 = vsyncadd [#allocation7], %s36
      %s38 = sshll.u32 [#allocation6], 4
      %s39 = int_to_ptr.vmem [resolvable:$true] %s38
      %44 = dma.hbm_to_vmem [thread:$0]  %s1, 512, %s39, [#allocation7], 64, 64, 4
    $region9: #{tpu_custom_call.1} parent=1 // pred_fallthru
      _
    // Predicated region
    $region10: #{tpu_custom_call.1} parent=1 // pred_check
      _
    $region11: #{tpu_custom_call.1} parent=1 // pred_check_branch
      %46 = sbr.rel (0) target = $region13
    $region12: #{tpu_custom_call.1} parent=1 // pred_region
      %s48 = ssub.s32 512, 512
      %49 = vsyncadd [#allocation7], %s48
      %s50 = sshll.u32 [#allocation8], 4
      %s51 = int_to_ptr.vmem [resolvable:$true] %s50
      %56 = dma.hbm_to_vmem [thread:$0]  %s2, 512, %s51, [#allocation7], 64, 64, 4
    $region13: #{tpu_custom_call.1} parent=1 // pred_fallthru
      _
    // Predicated region
    $region14: #{tpu_custom_call.1} parent=1 // pred_check
      _
    $region15: #{tpu_custom_call.1} parent=1 // pred_check_branch
      %58 = sbr.rel (0) target = $region17
    $region16: #{tpu_custom_call.1} parent=1 // pred_region
      _
    $region17: #{tpu_custom_call.1} parent=1 // pred_fallthru
      _
    // Predicated region
    $region18: #{tpu_custom_call.1} parent=1 // pred_check
      _
    $region19: #{tpu_custom_call.1} parent=1 // pred_check_branch
      %60 = sbr.rel (0) target = $region21
    $region20: #{tpu_custom_call.1} parent=1 // pred_region
      _
    $region21: #{tpu_custom_call.1} parent=1 // pred_fallthru
      _
    // Predicated region
    $region22: #{tpu_custom_call.1} parent=1 // pred_check
      _
    $region23: #{tpu_custom_call.1} parent=1 // pred_check_branch
      %62 = sbr.rel (0) target = $region25
    $region24: #{tpu_custom_call.1} parent=1 // pred_region
      _
    $region25: #{tpu_custom_call.1} parent=1 // pred_fallthru
      _
    // Predicated region
    $region26: #{tpu_custom_call.1} parent=1 // pred_check
      _
    $region27: #{tpu_custom_call.1} parent=1 // pred_check_branch
      %64 = sbr.rel (0) target = $region29
    $region28: #{tpu_custom_call.1} parent=1 // pred_region
      _
    $region29: #{tpu_custom_call.1} parent=1 // pred_fallthru
      _
    // Predicated region
    $region30: #{tpu_custom_call.1} parent=1 // pred_check
      _
    $region31: #{tpu_custom_call.1} parent=1 // pred_check_branch
      %66 = sbr.rel (0) target = $region33
    $region32: #{tpu_custom_call.1} parent=1 // pred_region
      _
    $region33: #{tpu_custom_call.1} parent=1 // pred_fallthru
      _
    // Predicated region
    $region34: #{tpu_custom_call.1} parent=1 // pred_check
      _
    $region35: #{tpu_custom_call.1} parent=1 // pred_check_branch
      %68 = sbr.rel (0) target = $region37
    $region36: #{tpu_custom_call.1} parent=1 // pred_region
      %69 = dma.done [#allocation4], 128
    $region37: #{tpu_custom_call.1} parent=1 // pred_fallthru
      _
    // Predicated region
    $region38: #{tpu_custom_call.1} parent=1 // pred_check
      _
    $region39: #{tpu_custom_call.1} parent=1 // pred_check_branch
      %71 = sbr.rel (0) target = $region41
    $region40: #{tpu_custom_call.1} parent=1 // pred_region
      %72 = dma.done [#allocation7], 512
    $region41: #{tpu_custom_call.1} parent=1 // pred_fallthru
      _
    // Predicated region
    $region42: #{tpu_custom_call.1} parent=1 // pred_check
      _
    $region43: #{tpu_custom_call.1} parent=1 // pred_check_branch
      %74 = sbr.rel (0) target = $region45
    $region44: #{tpu_custom_call.1} parent=1 // pred_region
      %75 = dma.done [#allocation7], 512
    $region45: #{tpu_custom_call.1} parent=1 // pred_fallthru
      _
    %v77 = vlaneseq
    %v78 = vand.u32 %v77, 127
    %vm79 = vcmp.ge.s32.totalorder %v78, 96
    %v80 = vld [vmem:[#allocation3] sm:$0x1]
    %v81 = vld [vmem:[#allocation3 + $0x1] sm:$0x1]
    %v82 = vld [vmem:[#allocation3 + $0x2] sm:$0x1]
    %v83 = vld [vmem:[#allocation3 + $0x3] sm:$0x1]
    %v84 = vld [vmem:[#allocation3 + $0x4] sm:$0x1]
    %v85 = vld [vmem:[#allocation3 + $0x5] sm:$0x1]
    %v86 = vld [vmem:[#allocation3 + $0x6] sm:$0x1]
    %v87 = vld [vmem:[#allocation3 + $0x7] sm:$0x1]
    %v88 = vld [vmem:[#allocation6] sm:$0xf]
    %v89 = vld [vmem:[#allocation6 + $0x4] sm:$0xf]
    %v90 = vld [vmem:[#allocation6 + $0x8] sm:$0xf]
    %v91 = vld [vmem:[#allocation6 + $0xc] sm:$0xf]
    %v92 = vld [vmem:[#allocation8] sm:$0xf]
    %v93 = vld [vmem:[#allocation8 + $0x4] sm:$0xf]
    %v94 = vld [vmem:[#allocation8 + $0x8] sm:$0xf]
    %v95 = vld [vmem:[#allocation8 + $0xc] sm:$0xf]
    %v96 = vld [vmem:[%s3] sm:$0x1]
    %v97 = vpack.c.bf16 %v80, %v80
    %v98 = vpack.c.bf16 %v81, %v81
    %v99 = vpack.c.bf16 %v82, %v82
    %v100 = vpack.c.bf16 %v83, %v83
    %v101 = vpack.c.bf16 %v84, %v84
    %v102 = vpack.c.bf16 %v85, %v85
    %v103 = vpack.c.bf16 %v86, %v86
    %v104 = vpack.c.bf16 %v87, %v87
    %v106 = vlaneseq
    %v107 = vshrl.u32 %v106, 7
    %v108 = vsub.s32 0, %v107
    %v109 = vrot.slane %v96, %v108
    %v119 = vunpack.c.l.b16 %v97
    %v120 = vunpack.c.l.b16 %v98
    %v121 = vunpack.c.l.b16 %v99
    %v122 = vunpack.c.l.b16 %v100
    %v123 = vunpack.c.l.b16 %v101
    %v124 = vunpack.c.l.b16 %v102
    %v125 = vunpack.c.l.b16 %v103
    %v126 = vunpack.c.l.b16 %v104
    %v127 = vrot.slane %v120, 7
    %vm128 = vcmask 1041409
    %v129 = vsel %vm128, %v127, %v119
    %v130 = vrot.slane %v121, 6
    %vm131 = vcmask 1042434
    %v132 = vsel %vm131, %v130, %v129
    %v133 = vrot.slane %v122, 5
    %vm134 = vcmask 1043459
    %v135 = vsel %vm134, %v133, %v132
    %v136 = vrot.slane %v123, 4
    %vm137 = vcmask 1044484
    %v138 = vsel %vm137, %v136, %v135
    %v139 = vrot.slane %v124, 3
    %vm140 = vcmask 1045509
    %v141 = vsel %vm140, %v139, %v138
    %v142 = vrot.slane %v125, 2
    %vm143 = vcmask 1046534
    %v144 = vsel %vm143, %v142, %v141
    %v145 = vrot.slane %v126, 1
    %vm146 = vcmask 1047559
    %v147 = vsel %vm146, %v145, %v144
    %v148 = vpack.c.b16 %v147, %v147
    %v153 = vunpack.c.l.b16 %v88
    %v154 = vunpack.c.l.b16 %v89
    %v155 = vunpack.c.l.b16 %v90
    %v156 = vunpack.c.l.b16 %v91
    %v157 = vpack.c.b16 %v154, %v153
    %v158 = vpack.c.b16 %v156, %v155
    %vm161 = vcmask 261120
    %v163 = vsel %vm161, %v148, 0
    %165 = vmatprep.subr.bf16.mxu0 0
    %166 = vmatpush1.bf16.msra.mxu0 %v157
    %167 = vmatprep.subr.bf16.mxu0 0
    %168 = vmatpush1.bf16.msra.mxu0 %v158
    %169 = vmatprep.subr.bf16.mxu0 0
    %170 = vmatpush1.bf16.msra.mxu0 0
    %171 = vmatprep.subr.bf16.mxu0 0
    %172 = vmatpush1.bf16.msra.mxu0 0
    %173 = vmatprep.subr.bf16.mxu0 0
    %174 = vmatpush1.bf16.msra.mxu0 0
    %175 = vmatprep.subr.bf16.mxu0 0
    %176 = vmatpush1.bf16.msra.mxu0 0
    %177 = vmatprep.subr.bf16.mxu0 0
    %178 = vmatpush1.bf16.msra.mxu0 0
    %179 = vmatprep.subr.bf16.mxu0 0
    %180 = vmatpush1.bf16.msra.mxu0 0
    %181 = vmatprep.subr.bf16.mxu0 0
    %182 = vmatpush1.bf16.msra.mxu0 0
    %183 = vmatprep.subr.bf16.mxu0 0
    %184 = vmatpush1.bf16.msra.mxu0 0
    %185 = vmatprep.subr.bf16.mxu0 0
    %186 = vmatpush1.bf16.msra.mxu0 0
    %187 = vmatprep.subr.bf16.mxu0 0
    %188 = vmatpush1.bf16.msra.mxu0 0
    %189 = vmatprep.subr.bf16.mxu0 0
    %190 = vmatpush1.bf16.msra.mxu0 0
    %191 = vmatprep.subr.bf16.mxu0 0
    %192 = vmatpush1.bf16.msra.mxu0 0
    %193 = vmatprep.subr.bf16.mxu0 0
    %194 = vmatpush1.bf16.msra.mxu0 0
    %195 = vmatprep.subr.bf16.mxu0 0
    %196 = vmatpush1.bf16.msra.mxu0 0
    %197 = vmatprep.mubr.bf16.mxu0 0
    %198 = vmatmul.mubr.bf16.gmra.mrb[0].mxu0 %v163
    %v199 = vpop.f32.mrb[0].mxu0
    %v200 = vadd.f32 %v109, %v199
    %v201 = vpop.f32.mrb[0].mxu0
    %v202 = vpop.f32.mrb[0].mxu0
    %v203 = vpop.f32.mrb[0].mxu0
    %204 = vdwg.mxu0
    %v209 = vunpack.c.l.b16 %v92
    %v210 = vunpack.c.l.b16 %v93
    %v211 = vunpack.c.l.b16 %v94
    %v212 = vunpack.c.l.b16 %v95
    %v213 = vpack.c.b16 %v210, %v209
    %v214 = vpack.c.b16 %v212, %v211
    %v218 = vsel %vm161, 0, 0
    %220 = vmatprep.subr.bf16.mxu0 0
    %221 = vmatpush1.bf16.msra.mxu0 %v213
    %222 = vmatprep.subr.bf16.mxu0 0
    %223 = vmatpush1.bf16.msra.mxu0 %v214
    %224 = vmatprep.subr.bf16.mxu0 0
    %225 = vmatpush1.bf16.msra.mxu0 0
    %226 = vmatprep.subr.bf16.mxu0 0
    %227 = vmatpush1.bf16.msra.mxu0 0
    %228 = vmatprep.subr.bf16.mxu0 0
    %229 = vmatpush1.bf16.msra.mxu0 0
    %230 = vmatprep.subr.bf16.mxu0 0
    %231 = vmatpush1.bf16.msra.mxu0 0
    %232 = vmatprep.subr.bf16.mxu0 0
    %233 = vmatpush1.bf16.msra.mxu0 0
    %234 = vmatprep.subr.bf16.mxu0 0
    %235 = vmatpush1.bf16.msra.mxu0 0
    %236 = vmatprep.subr.bf16.mxu0 0
    %237 = vmatpush1.bf16.msra.mxu0 0
    %238 = vmatprep.subr.bf16.mxu0 0
    %239 = vmatpush1.bf16.msra.mxu0 0
    %240 = vmatprep.subr.bf16.mxu0 0
    %241 = vmatpush1.bf16.msra.mxu0 0
    %242 = vmatprep.subr.bf16.mxu0 0
    %243 = vmatpush1.bf16.msra.mxu0 0
    %244 = vmatprep.subr.bf16.mxu0 0
    %245 = vmatpush1.bf16.msra.mxu0 0
    %246 = vmatprep.subr.bf16.mxu0 0
    %247 = vmatpush1.bf16.msra.mxu0 0
    %248 = vmatprep.subr.bf16.mxu0 0
    %249 = vmatpush1.bf16.msra.mxu0 0
    %250 = vmatprep.subr.bf16.mxu0 0
    %251 = vmatpush1.bf16.msra.mxu0 0
    %252 = vmatprep.mubr.bf16.mxu0 0
    %253 = vmatmul.mubr.bf16.gmra.mrb[0].mxu0 %v218
    %v254 = vpop.f32.mrb[0].mxu0
    %v255 = vadd.f32 0.0, %v254
    %v256 = vpop.f32.mrb[0].mxu0
    %v257 = vpop.f32.mrb[0].mxu0
    %v258 = vpop.f32.mrb[0].mxu0
    %259 = vdwg.mxu0
    %v260 = vadd.f32 %v200, %v255
    %v261 = vtanh.pop %v260
    %v262 = vxor.u32 %v260, 2147483648
    %v263 = vmul.f32 %v262, 1.442695
    %v264 = vpow.pop %v263
    %v265 = vadd.f32 %v264, 1.0
    %v266 = vrcp.pop %v265
    %v267 = vmul.f32 1.0, %v266
    %v268 = vsel %vm79, %v261, %v267
    %269 = vrot.lane.b32.xlu0 %v268, 64
    %v270 = vpop.permute.xlu0 %269
    %v271 = vmul.f32 %v268, %v270
    %v272 = vmul.f32 %v268, 0.0
    %274 = vrot.lane.b32.xlu0 %v271, 96
    %v275 = vpop.permute.xlu0 %274
    %v277 = vadd.f32 %v272, %v275
    %v278 = vtanh.pop %v277
    %v279 = vmul.f32 %v270, %v278
    %v280 = vpack.c.bf16 %v279, %v279
    %v282 = vsel %vm161, %v280, 0
    %284 = vmatprep.subr.bf16.mxu0 0
    %285 = vmatpush1.bf16.msra.mxu0 %v213
    %286 = vmatprep.subr.bf16.mxu0 0
    %287 = vmatpush1.bf16.msra.mxu0 %v214
    %288 = vmatprep.subr.bf16.mxu0 0
    %289 = vmatpush1.bf16.msra.mxu0 0
    %290 = vmatprep.subr.bf16.mxu0 0
    %291 = vmatpush1.bf16.msra.mxu0 0
    %292 = vmatprep.subr.bf16.mxu0 0
    %293 = vmatpush1.bf16.msra.mxu0 0
    %294 = vmatprep.subr.bf16.mxu0 0
    %295 = vmatpush1.bf16.msra.mxu0 0
    %296 = vmatprep.subr.bf16.mxu0 0
    %297 = vmatpush1.bf16.msra.mxu0 0
    %298 = vmatprep.subr.bf16.mxu0 0
    %299 = vmatpush1.bf16.msra.mxu0 0
    %300 = vmatprep.subr.bf16.mxu0 0
    %301 = vmatpush1.bf16.msra.mxu0 0
    %302 = vmatprep.subr.bf16.mxu0 0
    %303 = vmatpush1.bf16.msra.mxu0 0
    %304 = vmatprep.subr.bf16.mxu0 0
    %305 = vmatpush1.bf16.msra.mxu0 0
    %306 = vmatprep.subr.bf16.mxu0 0
    %307 = vmatpush1.bf16.msra.mxu0 0
    %308 = vmatprep.subr.bf16.mxu0 0
    %309 = vmatpush1.bf16.msra.mxu0 0
    %310 = vmatprep.subr.bf16.mxu0 0
    %311 = vmatpush1.bf16.msra.mxu0 0
    %312 = vmatprep.subr.bf16.mxu0 0
    %313 = vmatpush1.bf16.msra.mxu0 0
    %314 = vmatprep.subr.bf16.mxu0 0
    %315 = vmatpush1.bf16.msra.mxu0 0
    %316 = vmatprep.mubr.bf16.mxu0 0
    %317 = vmatmul.mubr.bf16.gmra.mrb[0].mxu0 %v282
    %v318 = vpop.f32.mrb[0].mxu0
    %v319 = vadd.f32 0.0, %v318
    %v320 = vpop.f32.mrb[0].mxu0
    %v321 = vpop.f32.mrb[0].mxu0
    %v322 = vpop.f32.mrb[0].mxu0
    %323 = vdwg.mxu0
    %v325 = vrot.slane %v319, 7
    %v327 = vadd.f32 %v200, %v325
    %v328 = vtanh.pop %v327
    %v329 = vxor.u32 %v327, 2147483648
    %v330 = vmul.f32 %v329, 1.442695
    %v331 = vpow.pop %v330
    %v332 = vadd.f32 %v331, 1.0
    %v333 = vrcp.pop %v332
    %v334 = vmul.f32 1.0, %v333
    %v335 = vsel %vm79, %v328, %v334
    %v337 = vrot.slane %v335, 1
    %339 = vrot.lane.b32.xlu0 %v337, 64
    %v340 = vpop.permute.xlu0 %339
    %v342 = vrot.slane %v340, 7
    %v344 = vmul.f32 %v335, %v342
    %v346 = vrot.slane %v277, 7
    %v348 = vmul.f32 %v335, %v346
    %350 = vrot.lane.b32.xlu0 %v344, 96
    %v351 = vpop.permute.xlu0 %350
    %v353 = vadd.f32 %v348, %v351
    %v354 = vtanh.pop %v353
    %v356 = vrot.slane %v354, 1
    %v358 = vmul.f32 %v340, %v356
    %v359 = vpack.c.bf16 %v358, %v358
    %v361 = vsel %vm161, %v359, 0
    %363 = vmatprep.subr.bf16.mxu0 0
    %364 = vmatpush1.bf16.msra.mxu0 %v213
    %365 = vmatprep.subr.bf16.mxu0 0
    %366 = vmatpush1.bf16.msra.mxu0 %v214
    %367 = vmatprep.subr.bf16.mxu0 0
    %368 = vmatpush1.bf16.msra.mxu0 0
    %369 = vmatprep.subr.bf16.mxu0 0
    %370 = vmatpush1.bf16.msra.mxu0 0
    %371 = vmatprep.subr.bf16.mxu0 0
    %372 = vmatpush1.bf16.msra.mxu0 0
    %373 = vmatprep.subr.bf16.mxu0 0
    %374 = vmatpush1.bf16.msra.mxu0 0
    %375 = vmatprep.subr.bf16.mxu0 0
    %376 = vmatpush1.bf16.msra.mxu0 0
    %377 = vmatprep.subr.bf16.mxu0 0
    %378 = vmatpush1.bf16.msra.mxu0 0
    %379 = vmatprep.subr.bf16.mxu0 0
    %380 = vmatpush1.bf16.msra.mxu0 0
    %381 = vmatprep.subr.bf16.mxu0 0
    %382 = vmatpush1.bf16.msra.mxu0 0
    %383 = vmatprep.subr.bf16.mxu0 0
    %384 = vmatpush1.bf16.msra.mxu0 0
    %385 = vmatprep.subr.bf16.mxu0 0
    %386 = vmatpush1.bf16.msra.mxu0 0
    %387 = vmatprep.subr.bf16.mxu0 0
    %388 = vmatpush1.bf16.msra.mxu0 0
    %389 = vmatprep.subr.bf16.mxu0 0
    %390 = vmatpush1.bf16.msra.mxu0 0
    %391 = vmatprep.subr.bf16.mxu0 0
    %392 = vmatpush1.bf16.msra.mxu0 0
    %393 = vmatprep.subr.bf16.mxu0 0
    %394 = vmatpush1.bf16.msra.mxu0 0
    %395 = vmatprep.mubr.bf16.mxu0 0
    %396 = vmatmul.mubr.bf16.gmra.mrb[0].mxu0 %v361
    %v397 = vpop.f32.mrb[0].mxu0
    %v398 = vadd.f32 0.0, %v397
    %v399 = vpop.f32.mrb[0].mxu0
    %v400 = vpop.f32.mrb[0].mxu0
    %v401 = vpop.f32.mrb[0].mxu0
    %402 = vdwg.mxu0
    %v404 = vrot.slane %v398, 6
    %v406 = vadd.f32 %v200, %v404
    %v407 = vtanh.pop %v406
    %v408 = vxor.u32 %v406, 2147483648
    %v409 = vmul.f32 %v408, 1.442695
    %v410 = vpow.pop %v409
    %v411 = vadd.f32 %v410, 1.0
    %v412 = vrcp.pop %v411
    %v413 = vmul.f32 1.0, %v412
    %v414 = vsel %vm79, %v407, %v413
    %v416 = vrot.slane %v414, 2
    %418 = vrot.lane.b32.xlu0 %v416, 64
    %v419 = vpop.permute.xlu0 %418
    %v421 = vrot.slane %v419, 6
    %v423 = vmul.f32 %v414, %v421
    %v425 = vrot.slane %v353, 7
    %v427 = vmul.f32 %v414, %v425
    %429 = vrot.lane.b32.xlu0 %v423, 96
    %v430 = vpop.permute.xlu0 %429
    %v432 = vadd.f32 %v427, %v430
    %v433 = vtanh.pop %v432
    %v435 = vrot.slane %v433, 2
    %v437 = vmul.f32 %v419, %v435
    %v438 = vpack.c.bf16 %v437, %v437
    %v440 = vsel %vm161, %v438, 0
    %442 = vmatprep.subr.bf16.mxu0 0
    %443 = vmatpush1.bf16.msra.mxu0 %v213
    %444 = vmatprep.subr.bf16.mxu0 0
    %445 = vmatpush1.bf16.msra.mxu0 %v214
    %446 = vmatprep.subr.bf16.mxu0 0
    %447 = vmatpush1.bf16.msra.mxu0 0
    %448 = vmatprep.subr.bf16.mxu0 0
    %449 = vmatpush1.bf16.msra.mxu0 0
    %450 = vmatprep.subr.bf16.mxu0 0
    %451 = vmatpush1.bf16.msra.mxu0 0
    %452 = vmatprep.subr.bf16.mxu0 0
    %453 = vmatpush1.bf16.msra.mxu0 0
    %454 = vmatprep.subr.bf16.mxu0 0
    %455 = vmatpush1.bf16.msra.mxu0 0
    %456 = vmatprep.subr.bf16.mxu0 0
    %457 = vmatpush1.bf16.msra.mxu0 0
    %458 = vmatprep.subr.bf16.mxu0 0
    %459 = vmatpush1.bf16.msra.mxu0 0
    %460 = vmatprep.subr.bf16.mxu0 0
    %461 = vmatpush1.bf16.msra.mxu0 0
    %462 = vmatprep.subr.bf16.mxu0 0
    %463 = vmatpush1.bf16.msra.mxu0 0
    %464 = vmatprep.subr.bf16.mxu0 0
    %465 = vmatpush1.bf16.msra.mxu0 0
    %466 = vmatprep.subr.bf16.mxu0 0
    %467 = vmatpush1.bf16.msra.mxu0 0
    %468 = vmatprep.subr.bf16.mxu0 0
    %469 = vmatpush1.bf16.msra.mxu0 0
    %470 = vmatprep.subr.bf16.mxu0 0
    %471 = vmatpush1.bf16.msra.mxu0 0
    %472 = vmatprep.subr.bf16.mxu0 0
    %473 = vmatpush1.bf16.msra.mxu0 0
    %474 = vmatprep.mubr.bf16.mxu0 0
    %475 = vmatmul.mubr.bf16.gmra.mrb[0].mxu0 %v440
    %v476 = vpop.f32.mrb[0].mxu0
    %v477 = vadd.f32 0.0, %v476
    %v478 = vpop.f32.mrb[0].mxu0
    %v479 = vpop.f32.mrb[0].mxu0
    %v480 = vpop.f32.mrb[0].mxu0
    %481 = vdwg.mxu0
    %v483 = vrot.slane %v477, 5
    %v485 = vadd.f32 %v200, %v483
    %v486 = vtanh.pop %v485
    %v487 = vxor.u32 %v485, 2147483648
    %v488 = vmul.f32 %v487, 1.442695
    %v489 = vpow.pop %v488
    %v490 = vadd.f32 %v489, 1.0
    %v491 = vrcp.pop %v490
    %v492 = vmul.f32 1.0, %v491
    %v493 = vsel %vm79, %v486, %v492
    %v495 = vrot.slane %v493, 3
    %497 = vrot.lane.b32.xlu0 %v495, 64
    %v498 = vpop.permute.xlu0 %497
    %v500 = vrot.slane %v498, 5
    %v502 = vmul.f32 %v493, %v500
    %v504 = vrot.slane %v432, 7
    %v506 = vmul.f32 %v493, %v504
    %508 = vrot.lane.b32.xlu0 %v502, 96
    %v509 = vpop.permute.xlu0 %508
    %v511 = vadd.f32 %v506, %v509
    %v512 = vtanh.pop %v511
    %v514 = vrot.slane %v512, 3
    %v516 = vmul.f32 %v498, %v514
    %v517 = vpack.c.bf16 %v516, %v516
    %v519 = vsel %vm161, %v517, 0
    %521 = vmatprep.subr.bf16.mxu0 0
    %522 = vmatpush1.bf16.msra.mxu0 %v213
    %523 = vmatprep.subr.bf16.mxu0 0
    %524 = vmatpush1.bf16.msra.mxu0 %v214
    %525 = vmatprep.subr.bf16.mxu0 0
    %526 = vmatpush1.bf16.msra.mxu0 0
    %527 = vmatprep.subr.bf16.mxu0 0
    %528 = vmatpush1.bf16.msra.mxu0 0
    %529 = vmatprep.subr.bf16.mxu0 0
    %530 = vmatpush1.bf16.msra.mxu0 0
    %531 = vmatprep.subr.bf16.mxu0 0
    %532 = vmatpush1.bf16.msra.mxu0 0
    %533 = vmatprep.subr.bf16.mxu0 0
    %534 = vmatpush1.bf16.msra.mxu0 0
    %535 = vmatprep.subr.bf16.mxu0 0
    %536 = vmatpush1.bf16.msra.mxu0 0
    %537 = vmatprep.subr.bf16.mxu0 0
    %538 = vmatpush1.bf16.msra.mxu0 0
    %539 = vmatprep.subr.bf16.mxu0 0
    %540 = vmatpush1.bf16.msra.mxu0 0
    %541 = vmatprep.subr.bf16.mxu0 0
    %542 = vmatpush1.bf16.msra.mxu0 0
    %543 = vmatprep.subr.bf16.mxu0 0
    %544 = vmatpush1.bf16.msra.mxu0 0
    %545 = vmatprep.subr.bf16.mxu0 0
    %546 = vmatpush1.bf16.msra.mxu0 0
    %547 = vmatprep.subr.bf16.mxu0 0
    %548 = vmatpush1.bf16.msra.mxu0 0
    %549 = vmatprep.subr.bf16.mxu0 0
    %550 = vmatpush1.bf16.msra.mxu0 0
    %551 = vmatprep.subr.bf16.mxu0 0
    %552 = vmatpush1.bf16.msra.mxu0 0
    %553 = vmatprep.mubr.bf16.mxu0 0
    %554 = vmatmul.mubr.bf16.gmra.mrb[0].mxu0 %v519
    %v555 = vpop.f32.mrb[0].mxu0
    %v556 = vadd.f32 0.0, %v555
    %v557 = vpop.f32.mrb[0].mxu0
    %v558 = vpop.f32.mrb[0].mxu0
    %v559 = vpop.f32.mrb[0].mxu0
    %560 = vdwg.mxu0
    %v562 = vrot.slane %v556, 4
    %v564 = vadd.f32 %v200, %v562
    %v565 = vtanh.pop %v564
    %v566 = vxor.u32 %v564, 2147483648
    %v567 = vmul.f32 %v566, 1.442695
    %v568 = vpow.pop %v567
    %v569 = vadd.f32 %v568, 1.0
    %v570 = vrcp.pop %v569
    %v571 = vmul.f32 1.0, %v570
    %v572 = vsel %vm79, %v565, %v571
    %v574 = vrot.slane %v572, 4
    %576 = vrot.lane.b32.xlu0 %v574, 64
    %v577 = vpop.permute.xlu0 %576
    %v579 = vrot.slane %v577, 4
    %v581 = vmul.f32 %v572, %v579
    %v583 = vrot.slane %v511, 7
    %v585 = vmul.f32 %v572, %v583
    %587 = vrot.lane.b32.xlu0 %v581, 96
    %v588 = vpop.permute.xlu0 %587
    %v590 = vadd.f32 %v585, %v588
    %v591 = vtanh.pop %v590
    %v593 = vrot.slane %v591, 4
    %v595 = vmul.f32 %v577, %v593
    %v596 = vpack.c.bf16 %v595, %v595
    %v598 = vsel %vm161, %v596, 0
    %600 = vmatprep.subr.bf16.mxu0 0
    %601 = vmatpush1.bf16.msra.mxu0 %v213
    %602 = vmatprep.subr.bf16.mxu0 0
    %603 = vmatpush1.bf16.msra.mxu0 %v214
    %604 = vmatprep.subr.bf16.mxu0 0
    %605 = vmatpush1.bf16.msra.mxu0 0
    %606 = vmatprep.subr.bf16.mxu0 0
    %607 = vmatpush1.bf16.msra.mxu0 0
    %608 = vmatprep.subr.bf16.mxu0 0
    %609 = vmatpush1.bf16.msra.mxu0 0
    %610 = vmatprep.subr.bf16.mxu0 0
    %611 = vmatpush1.bf16.msra.mxu0 0
    %612 = vmatprep.subr.bf16.mxu0 0
    %613 = vmatpush1.bf16.msra.mxu0 0
    %614 = vmatprep.subr.bf16.mxu0 0
    %615 = vmatpush1.bf16.msra.mxu0 0
    %616 = vmatprep.subr.bf16.mxu0 0
    %617 = vmatpush1.bf16.msra.mxu0 0
    %618 = vmatprep.subr.bf16.mxu0 0
    %619 = vmatpush1.bf16.msra.mxu0 0
    %620 = vmatprep.subr.bf16.mxu0 0
    %621 = vmatpush1.bf16.msra.mxu0 0
    %622 = vmatprep.subr.bf16.mxu0 0
    %623 = vmatpush1.bf16.msra.mxu0 0
    %624 = vmatprep.subr.bf16.mxu0 0
    %625 = vmatpush1.bf16.msra.mxu0 0
    %626 = vmatprep.subr.bf16.mxu0 0
    %627 = vmatpush1.bf16.msra.mxu0 0
    %628 = vmatprep.subr.bf16.mxu0 0
    %629 = vmatpush1.bf16.msra.mxu0 0
    %630 = vmatprep.subr.bf16.mxu0 0
    %631 = vmatpush1.bf16.msra.mxu0 0
    %632 = vmatprep.mubr.bf16.mxu0 0
    %633 = vmatmul.mubr.bf16.gmra.mrb[0].mxu0 %v598
    %v634 = vpop.f32.mrb[0].mxu0
    %v635 = vadd.f32 0.0, %v634
    %v636 = vpop.f32.mrb[0].mxu0
    %v637 = vpop.f32.mrb[0].mxu0
    %v638 = vpop.f32.mrb[0].mxu0
    %639 = vdwg.mxu0
    %v641 = vrot.slane %v635, 3
    %v643 = vadd.f32 %v200, %v641
    %v644 = vtanh.pop %v643
    %v645 = vxor.u32 %v643, 2147483648
    %v646 = vmul.f32 %v645, 1.442695
    %v647 = vpow.pop %v646
    %v648 = vadd.f32 %v647, 1.0
    %v649 = vrcp.pop %v648
    %v650 = vmul.f32 1.0, %v649
    %v651 = vsel %vm79, %v644, %v650
    %v653 = vrot.slane %v651, 5
    %655 = vrot.lane.b32.xlu0 %v653, 64
    %v656 = vpop.permute.xlu0 %655
    %v658 = vrot.slane %v656, 3
    %v660 = vmul.f32 %v651, %v658
    %v662 = vrot.slane %v590, 7
    %v664 = vmul.f32 %v651, %v662
    %666 = vrot.lane.b32.xlu0 %v660, 96
    %v667 = vpop.permute.xlu0 %666
    %v669 = vadd.f32 %v664, %v667
    %v670 = vtanh.pop %v669
    %v672 = vrot.slane %v670, 5
    %v674 = vmul.f32 %v656, %v672
    %v675 = vpack.c.bf16 %v674, %v674
    %v677 = vsel %vm161, %v675, 0
    %679 = vmatprep.subr.bf16.mxu0 0
    %680 = vmatpush1.bf16.msra.mxu0 %v213
    %681 = vmatprep.subr.bf16.mxu0 0
    %682 = vmatpush1.bf16.msra.mxu0 %v214
    %683 = vmatprep.subr.bf16.mxu0 0
    %684 = vmatpush1.bf16.msra.mxu0 0
    %685 = vmatprep.subr.bf16.mxu0 0
    %686 = vmatpush1.bf16.msra.mxu0 0
    %687 = vmatprep.subr.bf16.mxu0 0
    %688 = vmatpush1.bf16.msra.mxu0 0
    %689 = vmatprep.subr.bf16.mxu0 0
    %690 = vmatpush1.bf16.msra.mxu0 0
    %691 = vmatprep.subr.bf16.mxu0 0
    %692 = vmatpush1.bf16.msra.mxu0 0
    %693 = vmatprep.subr.bf16.mxu0 0
    %694 = vmatpush1.bf16.msra.mxu0 0
    %695 = vmatprep.subr.bf16.mxu0 0
    %696 = vmatpush1.bf16.msra.mxu0 0
    %697 = vmatprep.subr.bf16.mxu0 0
    %698 = vmatpush1.bf16.msra.mxu0 0
    %699 = vmatprep.subr.bf16.mxu0 0
    %700 = vmatpush1.bf16.msra.mxu0 0
    %701 = vmatprep.subr.bf16.mxu0 0
    %702 = vmatpush1.bf16.msra.mxu0 0
    %703 = vmatprep.subr.bf16.mxu0 0
    %704 = vmatpush1.bf16.msra.mxu0 0
    %705 = vmatprep.subr.bf16.mxu0 0
    %706 = vmatpush1.bf16.msra.mxu0 0
    %707 = vmatprep.subr.bf16.mxu0 0
    %708 = vmatpush1.bf16.msra.mxu0 0
    %709 = vmatprep.subr.bf16.mxu0 0
    %710 = vmatpush1.bf16.msra.mxu0 0
    %711 = vmatprep.mubr.bf16.mxu0 0
    %712 = vmatmul.mubr.bf16.gmra.mrb[0].mxu0 %v677
    %v713 = vpop.f32.mrb[0].mxu0
    %v714 = vadd.f32 0.0, %v713
    %v715 = vpop.f32.mrb[0].mxu0
    %v716 = vpop.f32.mrb[0].mxu0
    %v717 = vpop.f32.mrb[0].mxu0
    %718 = vdwg.mxu0
    %v720 = vrot.slane %v714, 2
    %v722 = vadd.f32 %v200, %v720
    %v723 = vtanh.pop %v722
    %v724 = vxor.u32 %v722, 2147483648
    %v725 = vmul.f32 %v724, 1.442695
    %v726 = vpow.pop %v725
    %v727 = vadd.f32 %v726, 1.0
    %v728 = vrcp.pop %v727
    %v729 = vmul.f32 1.0, %v728
    %v730 = vsel %vm79, %v723, %v729
    %v732 = vrot.slane %v730, 6
    %734 = vrot.lane.b32.xlu0 %v732, 64
    %v735 = vpop.permute.xlu0 %734
    %v737 = vrot.slane %v735, 2
    %v739 = vmul.f32 %v730, %v737
    %v741 = vrot.slane %v669, 7
    %v743 = vmul.f32 %v730, %v741
    %745 = vrot.lane.b32.xlu0 %v739, 96
    %v746 = vpop.permute.xlu0 %745
    %v748 = vadd.f32 %v743, %v746
    %v749 = vtanh.pop %v748
    %v751 = vrot.slane %v749, 6
    %v753 = vmul.f32 %v735, %v751
    %v754 = vpack.c.bf16 %v753, %v753
    %v756 = vsel %vm161, %v754, 0
    %758 = vmatprep.subr.bf16.mxu0 0
    %759 = vmatpush1.bf16.msra.mxu0 %v213
    %760 = vmatprep.subr.bf16.mxu0 0
    %761 = vmatpush1.bf16.msra.mxu0 %v214
    %762 = vmatprep.subr.bf16.mxu0 0
    %763 = vmatpush1.bf16.msra.mxu0 0
    %764 = vmatprep.subr.bf16.mxu0 0
    %765 = vmatpush1.bf16.msra.mxu0 0
    %766 = vmatprep.subr.bf16.mxu0 0
    %767 = vmatpush1.bf16.msra.mxu0 0
    %768 = vmatprep.subr.bf16.mxu0 0
    %769 = vmatpush1.bf16.msra.mxu0 0
    %770 = vmatprep.subr.bf16.mxu0 0
    %771 = vmatpush1.bf16.msra.mxu0 0
    %772 = vmatprep.subr.bf16.mxu0 0
    %773 = vmatpush1.bf16.msra.mxu0 0
    %774 = vmatprep.subr.bf16.mxu0 0
    %775 = vmatpush1.bf16.msra.mxu0 0
    %776 = vmatprep.subr.bf16.mxu0 0
    %777 = vmatpush1.bf16.msra.mxu0 0
    %778 = vmatprep.subr.bf16.mxu0 0
    %779 = vmatpush1.bf16.msra.mxu0 0
    %780 = vmatprep.subr.bf16.mxu0 0
    %781 = vmatpush1.bf16.msra.mxu0 0
    %782 = vmatprep.subr.bf16.mxu0 0
    %783 = vmatpush1.bf16.msra.mxu0 0
    %784 = vmatprep.subr.bf16.mxu0 0
    %785 = vmatpush1.bf16.msra.mxu0 0
    %786 = vmatprep.subr.bf16.mxu0 0
    %787 = vmatpush1.bf16.msra.mxu0 0
    %788 = vmatprep.subr.bf16.mxu0 0
    %789 = vmatpush1.bf16.msra.mxu0 0
    %790 = vmatprep.mubr.bf16.mxu0 0
    %791 = vmatmul.mubr.bf16.gmra.mrb[0].mxu0 %v756
    %v792 = vpop.f32.mrb[0].mxu0
    %v793 = vadd.f32 0.0, %v792
    %v794 = vpop.f32.mrb[0].mxu0
    %v795 = vpop.f32.mrb[0].mxu0
    %v796 = vpop.f32.mrb[0].mxu0
    %797 = vdwg.mxu0
    %v799 = vrot.slane %v793, 1
    %v801 = vadd.f32 %v200, %v799
    %v802 = vtanh.pop %v801
    %v803 = vxor.u32 %v801, 2147483648
    %v804 = vmul.f32 %v803, 1.442695
    %v805 = vpow.pop %v804
    %v806 = vadd.f32 %v805, 1.0
    %v807 = vrcp.pop %v806
    %v808 = vmul.f32 1.0, %v807
    %v809 = vsel %vm79, %v802, %v808
    %v811 = vrot.slane %v809, 7
    %813 = vrot.lane.b32.xlu0 %v811, 64
    %v814 = vpop.permute.xlu0 %813
    %v816 = vrot.slane %v814, 1
    %v818 = vmul.f32 %v809, %v816
    %v820 = vrot.slane %v748, 7
    %v822 = vmul.f32 %v809, %v820
    %824 = vrot.lane.b32.xlu0 %v818, 96
    %v825 = vpop.permute.xlu0 %824
    %v827 = vadd.f32 %v822, %v825
    %v828 = vtanh.pop %v827
    %v830 = vrot.slane %v828, 7
    %v832 = vmul.f32 %v814, %v830
    %s833 = scalar_lea.vmem [#allocation6], 16
    %v834 = vld [vmem:[%s833] sm:$0xf]
    %v835 = vld [vmem:[%s833 + $0x4] sm:$0xf]
    %v836 = vld [vmem:[%s833 + $0x8] sm:$0xf]
    %v837 = vld [vmem:[%s833 + $0xc] sm:$0xf]
    %s838 = scalar_lea.vmem [#allocation8], 16
    %v839 = vld [vmem:[%s838] sm:$0xf]
    %v840 = vld [vmem:[%s838 + $0x4] sm:$0xf]
    %v841 = vld [vmem:[%s838 + $0x8] sm:$0xf]
    %v842 = vld [vmem:[%s838 + $0xc] sm:$0xf]
    %s843 = scalar_lea.vmem %s3, 1
    %v844 = vld [vmem:[%s843] sm:$0x1]
    %v845 = vpack.c.bf16 %v832, %v832
    %v847 = vlaneseq
    %v848 = vshrl.u32 %v847, 7
    %v849 = vsub.s32 0, %v848
    %v850 = vrot.slane %v844, %v849
    %v860 = vunpack.c.l.b16 %v280
    %v861 = vunpack.c.l.b16 %v359
    %v862 = vunpack.c.l.b16 %v438
    %v863 = vunpack.c.l.b16 %v517
    %v864 = vunpack.c.l.b16 %v596
    %v865 = vunpack.c.l.b16 %v675
    %v866 = vunpack.c.l.b16 %v754
    %v867 = vunpack.c.l.b16 %v845
    %v868 = vrot.slane %v861, 7
    %v869 = vsel %vm128, %v868, %v860
    %v870 = vrot.slane %v862, 6
    %v871 = vsel %vm131, %v870, %v869
    %v872 = vrot.slane %v863, 5
    %v873 = vsel %vm134, %v872, %v871
    %v874 = vrot.slane %v864, 4
    %v875 = vsel %vm137, %v874, %v873
    %v876 = vrot.slane %v865, 3
    %v877 = vsel %vm140, %v876, %v875
    %v878 = vrot.slane %v866, 2
    %v879 = vsel %vm143, %v878, %v877
    %v880 = vrot.slane %v867, 1
    %v881 = vsel %vm146, %v880, %v879
    %v882 = vpack.c.b16 %v881, %v881
    %v887 = vunpack.c.l.b16 %v834
    %v888 = vunpack.c.l.b16 %v835
    %v889 = vunpack.c.l.b16 %v836
    %v890 = vunpack.c.l.b16 %v837
    %v891 = vpack.c.b16 %v888, %v887
    %v892 = vpack.c.b16 %v890, %v889
    %v896 = vsel %vm161, %v882, 0
    %898 = vmatprep.subr.bf16.mxu0 0
    %899 = vmatpush1.bf16.msra.mxu0 %v891
    %900 = vmatprep.subr.bf16.mxu0 0
    %901 = vmatpush1.bf16.msra.mxu0 %v892
    %902 = vmatprep.subr.bf16.mxu0 0
    %903 = vmatpush1.bf16.msra.mxu0 0
    %904 = vmatprep.subr.bf16.mxu0 0
    %905 = vmatpush1.bf16.msra.mxu0 0
    %906 = vmatprep.subr.bf16.mxu0 0
    %907 = vmatpush1.bf16.msra.mxu0 0
    %908 = vmatprep.subr.bf16.mxu0 0
    %909 = vmatpush1.bf16.msra.mxu0 0
    %910 = vmatprep.subr.bf16.mxu0 0
    %911 = vmatpush1.bf16.msra.mxu0 0
    %912 = vmatprep.subr.bf16.mxu0 0
    %913 = vmatpush1.bf16.msra.mxu0 0
    %914 = vmatprep.subr.bf16.mxu0 0
    %915 = vmatpush1.bf16.msra.mxu0 0
    %916 = vmatprep.subr.bf16.mxu0 0
    %917 = vmatpush1.bf16.msra.mxu0 0
    %918 = vmatprep.subr.bf16.mxu0 0
    %919 = vmatpush1.bf16.msra.mxu0 0
    %920 = vmatprep.subr.bf16.mxu0 0
    %921 = vmatpush1.bf16.msra.mxu0 0
    %922 = vmatprep.subr.bf16.mxu0 0
    %923 = vmatpush1.bf16.msra.mxu0 0
    %924 = vmatprep.subr.bf16.mxu0 0
    %925 = vmatpush1.bf16.msra.mxu0 0
    %926 = vmatprep.subr.bf16.mxu0 0
    %927 = vmatpush1.bf16.msra.mxu0 0
    %928 = vmatprep.subr.bf16.mxu0 0
    %929 = vmatpush1.bf16.msra.mxu0 0
    %930 = vmatprep.mubr.bf16.mxu0 0
    %931 = vmatmul.mubr.bf16.gmra.mrb[0].mxu0 %v896
    %v932 = vpop.f32.mrb[0].mxu0
    %v933 = vadd.f32 %v850, %v932
    %v934 = vpop.f32.mrb[0].mxu0
    %v935 = vpop.f32.mrb[0].mxu0
    %v936 = vpop.f32.mrb[0].mxu0
    %937 = vdwg.mxu0
    %v942 = vunpack.c.l.b16 %v839
    %v943 = vunpack.c.l.b16 %v840
    %v944 = vunpack.c.l.b16 %v841
    %v945 = vunpack.c.l.b16 %v842
    %v946 = vpack.c.b16 %v943, %v942
    %v947 = vpack.c.b16 %v945, %v944
    %950 = vmatprep.subr.bf16.mxu0 0
    %951 = vmatpush1.bf16.msra.mxu0 %v946
    %952 = vmatprep.subr.bf16.mxu0 0
    %953 = vmatpush1.bf16.msra.mxu0 %v947
    %954 = vmatprep.subr.bf16.mxu0 0
    %955 = vmatpush1.bf16.msra.mxu0 0
    %956 = vmatprep.subr.bf16.mxu0 0
    %957 = vmatpush1.bf16.msra.mxu0 0
    %958 = vmatprep.subr.bf16.mxu0 0
    %959 = vmatpush1.bf16.msra.mxu0 0
    %960 = vmatprep.subr.bf16.mxu0 0
    %961 = vmatpush1.bf16.msra.mxu0 0
    %962 = vmatprep.subr.bf16.mxu0 0
    %963 = vmatpush1.bf16.msra.mxu0 0
    %964 = vmatprep.subr.bf16.mxu0 0
    %965 = vmatpush1.bf16.msra.mxu0 0
    %966 = vmatprep.subr.bf16.mxu0 0
    %967 = vmatpush1.bf16.msra.mxu0 0
    %968 = vmatprep.subr.bf16.mxu0 0
    %969 = vmatpush1.bf16.msra.mxu0 0
    %970 = vmatprep.subr.bf16.mxu0 0
    %971 = vmatpush1.bf16.msra.mxu0 0
    %972 = vmatprep.subr.bf16.mxu0 0
    %973 = vmatpush1.bf16.msra.mxu0 0
    %974 = vmatprep.subr.bf16.mxu0 0
    %975 = vmatpush1.bf16.msra.mxu0 0
    %976 = vmatprep.subr.bf16.mxu0 0
    %977 = vmatpush1.bf16.msra.mxu0 0
    %978 = vmatprep.subr.bf16.mxu0 0
    %979 = vmatpush1.bf16.msra.mxu0 0
    %980 = vmatprep.subr.bf16.mxu0 0
    %981 = vmatpush1.bf16.msra.mxu0 0
    %982 = vmatprep.mubr.bf16.mxu0 0
    %983 = vmatmul.mubr.bf16.gmra.mrb[0].mxu0 %v218
    %v984 = vpop.f32.mrb[0].mxu0
    %v985 = vadd.f32 0.0, %v984
    %v986 = vpop.f32.mrb[0].mxu0
    %v987 = vpop.f32.mrb[0].mxu0
    %v988 = vpop.f32.mrb[0].mxu0
    %989 = vdwg.mxu0
    %v990 = vadd.f32 %v933, %v985
    %v991 = vtanh.pop %v990
    %v992 = vxor.u32 %v990, 2147483648
    %v993 = vmul.f32 %v992, 1.442695
    %v994 = vpow.pop %v993
    %v995 = vadd.f32 %v994, 1.0
    %v996 = vrcp.pop %v995
    %v997 = vmul.f32 1.0, %v996
    %v998 = vsel %vm79, %v991, %v997
    %999 = vrot.lane.b32.xlu0 %v998, 64
    %v1000 = vpop.permute.xlu0 %999
    %v1001 = vmul.f32 %v998, %v1000
    %v1002 = vmul.f32 %v998, 0.0
    %1004 = vrot.lane.b32.xlu0 %v1001, 96
    %v1005 = vpop.permute.xlu0 %1004
    %v1007 = vadd.f32 %v1002, %v1005
    %v1008 = vtanh.pop %v1007
    %v1009 = vmul.f32 %v1000, %v1008
    %v1010 = vpack.c.bf16 %v1009, %v1009
    %v1012 = vsel %vm161, %v1010, 0
    %1014 = vmatprep.subr.bf16.mxu0 0
    %1015 = vmatpush1.bf16.msra.mxu0 %v946
    %1016 = vmatprep.subr.bf16.mxu0 0
    %1017 = vmatpush1.bf16.msra.mxu0 %v947
    %1018 = vmatprep.subr.bf16.mxu0 0
    %1019 = vmatpush1.bf16.msra.mxu0 0
    %1020 = vmatprep.subr.bf16.mxu0 0
    %1021 = vmatpush1.bf16.msra.mxu0 0
    %1022 = vmatprep.subr.bf16.mxu0 0
    %1023 = vmatpush1.bf16.msra.mxu0 0
    %1024 = vmatprep.subr.bf16.mxu0 0
    %1025 = vmatpush1.bf16.msra.mxu0 0
    %1026 = vmatprep.subr.bf16.mxu0 0
    %1027 = vmatpush1.bf16.msra.mxu0 0
    %1028 = vmatprep.subr.bf16.mxu0 0
    %1029 = vmatpush1.bf16.msra.mxu0 0
    %1030 = vmatprep.subr.bf16.mxu0 0
    %1031 = vmatpush1.bf16.msra.mxu0 0
    %1032 = vmatprep.subr.bf16.mxu0 0
    %1033 = vmatpush1.bf16.msra.mxu0 0
    %1034 = vmatprep.subr.bf16.mxu0 0
    %1035 = vmatpush1.bf16.msra.mxu0 0
    %1036 = vmatprep.subr.bf16.mxu0 0
    %1037 = vmatpush1.bf16.msra.mxu0 0
    %1038 = vmatprep.subr.bf16.mxu0 0
    %1039 = vmatpush1.bf16.msra.mxu0 0
    %1040 = vmatprep.subr.bf16.mxu0 0
    %1041 = vmatpush1.bf16.msra.mxu0 0
    %1042 = vmatprep.subr.bf16.mxu0 0
    %1043 = vmatpush1.bf16.msra.mxu0 0
    %1044 = vmatprep.subr.bf16.mxu0 0
    %1045 = vmatpush1.bf16.msra.mxu0 0
    %1046 = vmatprep.mubr.bf16.mxu0 0
    %1047 = vmatmul.mubr.bf16.gmra.mrb[0].mxu0 %v1012
    %v1048 = vpop.f32.mrb[0].mxu0
    %v1049 = vadd.f32 0.0, %v1048
    %v1050 = vpop.f32.mrb[0].mxu0
    %v1051 = vpop.f32.mrb[0].mxu0
    %v1052 = vpop.f32.mrb[0].mxu0
    %1053 = vdwg.mxu0
    %v1055 = vrot.slane %v1049, 7
    %v1057 = vadd.f32 %v933, %v1055
    %v1058 = vtanh.pop %v1057
    %v1059 = vxor.u32 %v1057, 2147483648
    %v1060 = vmul.f32 %v1059, 1.442695
    %v1061 = vpow.pop %v1060
    %v1062 = vadd.f32 %v1061, 1.0
    %v1063 = vrcp.pop %v1062
    %v1064 = vmul.f32 1.0, %v1063
    %v1065 = vsel %vm79, %v1058, %v1064
    %v1067 = vrot.slane %v1065, 1
    %1069 = vrot.lane.b32.xlu0 %v1067, 64
    %v1070 = vpop.permute.xlu0 %1069
    %v1072 = vrot.slane %v1070, 7
    %v1074 = vmul.f32 %v1065, %v1072
    %v1076 = vrot.slane %v1007, 7
    %v1078 = vmul.f32 %v1065, %v1076
    %1080 = vrot.lane.b32.xlu0 %v1074, 96
    %v1081 = vpop.permute.xlu0 %1080
    %v1083 = vadd.f32 %v1078, %v1081
    %v1084 = vtanh.pop %v1083
    %v1086 = vrot.slane %v1084, 1
    %v1088 = vmul.f32 %v1070, %v1086
    %v1089 = vpack.c.bf16 %v1088, %v1088
    %v1091 = vsel %vm161, %v1089, 0
    %1093 = vmatprep.subr.bf16.mxu0 0
    %1094 = vmatpush1.bf16.msra.mxu0 %v946
    %1095 = vmatprep.subr.bf16.mxu0 0
    %1096 = vmatpush1.bf16.msra.mxu0 %v947
    %1097 = vmatprep.subr.bf16.mxu0 0
    %1098 = vmatpush1.bf16.msra.mxu0 0
    %1099 = vmatprep.subr.bf16.mxu0 0
    %1100 = vmatpush1.bf16.msra.mxu0 0
    %1101 = vmatprep.subr.bf16.mxu0 0
    %1102 = vmatpush1.bf16.msra.mxu0 0
    %1103 = vmatprep.subr.bf16.mxu0 0
    %1104 = vmatpush1.bf16.msra.mxu0 0
    %1105 = vmatprep.subr.bf16.mxu0 0
    %1106 = vmatpush1.bf16.msra.mxu0 0
    %1107 = vmatprep.subr.bf16.mxu0 0
    %1108 = vmatpush1.bf16.msra.mxu0 0
    %1109 = vmatprep.subr.bf16.mxu0 0
    %1110 = vmatpush1.bf16.msra.mxu0 0
    %1111 = vmatprep.subr.bf16.mxu0 0
    %1112 = vmatpush1.bf16.msra.mxu0 0
    %1113 = vmatprep.subr.bf16.mxu0 0
    %1114 = vmatpush1.bf16.msra.mxu0 0
    %1115 = vmatprep.subr.bf16.mxu0 0
    %1116 = vmatpush1.bf16.msra.mxu0 0
    %1117 = vmatprep.subr.bf16.mxu0 0
    %1118 = vmatpush1.bf16.msra.mxu0 0
    %1119 = vmatprep.subr.bf16.mxu0 0
    %1120 = vmatpush1.bf16.msra.mxu0 0
    %1121 = vmatprep.subr.bf16.mxu0 0
    %1122 = vmatpush1.bf16.msra.mxu0 0
    %1123 = vmatprep.subr.bf16.mxu0 0
    %1124 = vmatpush1.bf16.msra.mxu0 0
    %1125 = vmatprep.mubr.bf16.mxu0 0
    %1126 = vmatmul.mubr.bf16.gmra.mrb[0].mxu0 %v1091
    %v1127 = vpop.f32.mrb[0].mxu0
    %v1128 = vadd.f32 0.0, %v1127
    %v1129 = vpop.f32.mrb[0].mxu0
    %v1130 = vpop.f32.mrb[0].mxu0
    %v1131 = vpop.f32.mrb[0].mxu0
    %1132 = vdwg.mxu0
    %v1134 = vrot.slane %v1128, 6
    %v1136 = vadd.f32 %v933, %v1134
    %v1137 = vtanh.pop %v1136
    %v1138 = vxor.u32 %v1136, 2147483648
    %v1139 = vmul.f32 %v1138, 1.442695
    %v1140 = vpow.pop %v1139
    %v1141 = vadd.f32 %v1140, 1.0
    %v1142 = vrcp.pop %v1141
    %v1143 = vmul.f32 1.0, %v1142
    %v1144 = vsel %vm79, %v1137, %v1143
    %v1146 = vrot.slane %v1144, 2
    %1148 = vrot.lane.b32.xlu0 %v1146, 64
    %v1149 = vpop.permute.xlu0 %1148
    %v1151 = vrot.slane %v1149, 6
    %v1153 = vmul.f32 %v1144, %v1151
    %v1155 = vrot.slane %v1083, 7
    %v1157 = vmul.f32 %v1144, %v1155
    %1159 = vrot.lane.b32.xlu0 %v1153, 96
    %v1160 = vpop.permute.xlu0 %1159
    %v1162 = vadd.f32 %v1157, %v1160
    %v1163 = vtanh.pop %v1162
    %v1165 = vrot.slane %v1163, 2
    %v1167 = vmul.f32 %v1149, %v1165
    %v1168 = vpack.c.bf16 %v1167, %v1167
    %v1170 = vsel %vm161, %v1168, 0
    %1172 = vmatprep.subr.bf16.mxu0 0
    %1173 = vmatpush1.bf16.msra.mxu0 %v946
    %1174 = vmatprep.subr.bf16.mxu0 0
    %1175 = vmatpush1.bf16.msra.mxu0 %v947
    %1176 = vmatprep.subr.bf16.mxu0 0
    %1177 = vmatpush1.bf16.msra.mxu0 0
    %1178 = vmatprep.subr.bf16.mxu0 0
    %1179 = vmatpush1.bf16.msra.mxu0 0
    %1180 = vmatprep.subr.bf16.mxu0 0
    %1181 = vmatpush1.bf16.msra.mxu0 0
    %1182 = vmatprep.subr.bf16.mxu0 0
    %1183 = vmatpush1.bf16.msra.mxu0 0
    %1184 = vmatprep.subr.bf16.mxu0 0
    %1185 = vmatpush1.bf16.msra.mxu0 0
    %1186 = vmatprep.subr.bf16.mxu0 0
    %1187 = vmatpush1.bf16.msra.mxu0 0
    %1188 = vmatprep.subr.bf16.mxu0 0
    %1189 = vmatpush1.bf16.msra.mxu0 0
    %1190 = vmatprep.subr.bf16.mxu0 0
    %1191 = vmatpush1.bf16.msra.mxu0 0
    %1192 = vmatprep.subr.bf16.mxu0 0
    %1193 = vmatpush1.bf16.msra.mxu0 0
    %1194 = vmatprep.subr.bf16.mxu0 0
    %1195 = vmatpush1.bf16.msra.mxu0 0
    %1196 = vmatprep.subr.bf16.mxu0 0
    %1197 = vmatpush1.bf16.msra.mxu0 0
    %1198 = vmatprep.subr.bf16.mxu0 0
    %1199 = vmatpush1.bf16.msra.mxu0 0
    %1200 = vmatprep.subr.bf16.mxu0 0
    %1201 = vmatpush1.bf16.msra.mxu0 0
    %1202 = vmatprep.subr.bf16.mxu0 0
    %1203 = vmatpush1.bf16.msra.mxu0 0
    %1204 = vmatprep.mubr.bf16.mxu0 0
    %1205 = vmatmul.mubr.bf16.gmra.mrb[0].mxu0 %v1170
    %v1206 = vpop.f32.mrb[0].mxu0
    %v1207 = vadd.f32 0.0, %v1206
    %v1208 = vpop.f32.mrb[0].mxu0
    %v1209 = vpop.f32.mrb[0].mxu0
    %v1210 = vpop.f32.mrb[0].mxu0
    %1211 = vdwg.mxu0
    %v1213 = vrot.slane %v1207, 5
    %v1215 = vadd.f32 %v933, %v1213
    %v1216 = vtanh.pop %v1215
    %v1217 = vxor.u32 %v1215, 2147483648
    %v1218 = vmul.f32 %v1217, 1.442695
    %v1219 = vpow.pop %v1218
    %v1220 = vadd.f32 %v1219, 1.0
    %v1221 = vrcp.pop %v1220
    %v1222 = vmul.f32 1.0, %v1221
    %v1223 = vsel %vm79, %v1216, %v1222
    %v1225 = vrot.slane %v1223, 3
    %1227 = vrot.lane.b32.xlu0 %v1225, 64
    %v1228 = vpop.permute.xlu0 %1227
    %v1230 = vrot.slane %v1228, 5
    %v1232 = vmul.f32 %v1223, %v1230
    %v1234 = vrot.slane %v1162, 7
    %v1236 = vmul.f32 %v1223, %v1234
    %1238 = vrot.lane.b32.xlu0 %v1232, 96
    %v1239 = vpop.permute.xlu0 %1238
    %v1241 = vadd.f32 %v1236, %v1239
    %v1242 = vtanh.pop %v1241
    %v1244 = vrot.slane %v1242, 3
    %v1246 = vmul.f32 %v1228, %v1244
    %v1247 = vpack.c.bf16 %v1246, %v1246
    %v1249 = vsel %vm161, %v1247, 0
    %1251 = vmatprep.subr.bf16.mxu0 0
    %1252 = vmatpush1.bf16.msra.mxu0 %v946
    %1253 = vmatprep.subr.bf16.mxu0 0
    %1254 = vmatpush1.bf16.msra.mxu0 %v947
    %1255 = vmatprep.subr.bf16.mxu0 0
    %1256 = vmatpush1.bf16.msra.mxu0 0
    %1257 = vmatprep.subr.bf16.mxu0 0
    %1258 = vmatpush1.bf16.msra.mxu0 0
    %1259 = vmatprep.subr.bf16.mxu0 0
    %1260 = vmatpush1.bf16.msra.mxu0 0
    %1261 = vmatprep.subr.bf16.mxu0 0
    %1262 = vmatpush1.bf16.msra.mxu0 0
    %1263 = vmatprep.subr.bf16.mxu0 0
    %1264 = vmatpush1.bf16.msra.mxu0 0
    %1265 = vmatprep.subr.bf16.mxu0 0
    %1266 = vmatpush1.bf16.msra.mxu0 0
    %1267 = vmatprep.subr.bf16.mxu0 0
    %1268 = vmatpush1.bf16.msra.mxu0 0
    %1269 = vmatprep.subr.bf16.mxu0 0
    %1270 = vmatpush1.bf16.msra.mxu0 0
    %1271 = vmatprep.subr.bf16.mxu0 0
    %1272 = vmatpush1.bf16.msra.mxu0 0
    %1273 = vmatprep.subr.bf16.mxu0 0
    %1274 = vmatpush1.bf16.msra.mxu0 0
    %1275 = vmatprep.subr.bf16.mxu0 0
    %1276 = vmatpush1.bf16.msra.mxu0 0
    %1277 = vmatprep.subr.bf16.mxu0 0
    %1278 = vmatpush1.bf16.msra.mxu0 0
    %1279 = vmatprep.subr.bf16.mxu0 0
    %1280 = vmatpush1.bf16.msra.mxu0 0
    %1281 = vmatprep.subr.bf16.mxu0 0
    %1282 = vmatpush1.bf16.msra.mxu0 0
    %1283 = vmatprep.mubr.bf16.mxu0 0
    %1284 = vmatmul.mubr.bf16.gmra.mrb[0].mxu0 %v1249
    %v1285 = vpop.f32.mrb[0].mxu0
    %v1286 = vadd.f32 0.0, %v1285
    %v1287 = vpop.f32.mrb[0].mxu0
    %v1288 = vpop.f32.mrb[0].mxu0
    %v1289 = vpop.f32.mrb[0].mxu0
    %1290 = vdwg.mxu0
    %v1292 = vrot.slane %v1286, 4
    %v1294 = vadd.f32 %v933, %v1292
    %v1295 = vtanh.pop %v1294
    %v1296 = vxor.u32 %v1294, 2147483648
    %v1297 = vmul.f32 %v1296, 1.442695
    %v1298 = vpow.pop %v1297
    %v1299 = vadd.f32 %v1298, 1.0
    %v1300 = vrcp.pop %v1299
    %v1301 = vmul.f32 1.0, %v1300
    %v1302 = vsel %vm79, %v1295, %v1301
    %v1304 = vrot.slane %v1302, 4
    %1306 = vrot.lane.b32.xlu0 %v1304, 64
    %v1307 = vpop.permute.xlu0 %1306
    %v1309 = vrot.slane %v1307, 4
    %v1311 = vmul.f32 %v1302, %v1309
    %v1313 = vrot.slane %v1241, 7
    %v1315 = vmul.f32 %v1302, %v1313
    %1317 = vrot.lane.b32.xlu0 %v1311, 96
    %v1318 = vpop.permute.xlu0 %1317
    %v1320 = vadd.f32 %v1315, %v1318
    %v1321 = vtanh.pop %v1320
    %v1323 = vrot.slane %v1321, 4
    %v1325 = vmul.f32 %v1307, %v1323
    %v1326 = vpack.c.bf16 %v1325, %v1325
    %v1328 = vsel %vm161, %v1326, 0
    %1330 = vmatprep.subr.bf16.mxu0 0
    %1331 = vmatpush1.bf16.msra.mxu0 %v946
    %1332 = vmatprep.subr.bf16.mxu0 0
    %1333 = vmatpush1.bf16.msra.mxu0 %v947
    %1334 = vmatprep.subr.bf16.mxu0 0
    %1335 = vmatpush1.bf16.msra.mxu0 0
    %1336 = vmatprep.subr.bf16.mxu0 0
    %1337 = vmatpush1.bf16.msra.mxu0 0
    %1338 = vmatprep.subr.bf16.mxu0 0
    %1339 = vmatpush1.bf16.msra.mxu0 0
    %1340 = vmatprep.subr.bf16.mxu0 0
    %1341 = vmatpush1.bf16.msra.mxu0 0
    %1342 = vmatprep.subr.bf16.mxu0 0
    %1343 = vmatpush1.bf16.msra.mxu0 0
    %1344 = vmatprep.subr.bf16.mxu0 0
    %1345 = vmatpush1.bf16.msra.mxu0 0
    %1346 = vmatprep.subr.bf16.mxu0 0
    %1347 = vmatpush1.bf16.msra.mxu0 0
    %1348 = vmatprep.subr.bf16.mxu0 0
    %1349 = vmatpush1.bf16.msra.mxu0 0
    %1350 = vmatprep.subr.bf16.mxu0 0
    %1351 = vmatpush1.bf16.msra.mxu0 0
    %1352 = vmatprep.subr.bf16.mxu0 0
    %1353 = vmatpush1.bf16.msra.mxu0 0
    %1354 = vmatprep.subr.bf16.mxu0 0
    %1355 = vmatpush1.bf16.msra.mxu0 0
    %1356 = vmatprep.subr.bf16.mxu0 0
    %1357 = vmatpush1.bf16.msra.mxu0 0
    %1358 = vmatprep.subr.bf16.mxu0 0
    %1359 = vmatpush1.bf16.msra.mxu0 0
    %1360 = vmatprep.subr.bf16.mxu0 0
    %1361 = vmatpush1.bf16.msra.mxu0 0
    %1362 = vmatprep.mubr.bf16.mxu0 0
    %1363 = vmatmul.mubr.bf16.gmra.mrb[0].mxu0 %v1328
    %v1364 = vpop.f32.mrb[0].mxu0
    %v1365 = vadd.f32 0.0, %v1364
    %v1366 = vpop.f32.mrb[0].mxu0
    %v1367 = vpop.f32.mrb[0].mxu0
    %v1368 = vpop.f32.mrb[0].mxu0
    %1369 = vdwg.mxu0
    %v1371 = vrot.slane %v1365, 3
    %v1373 = vadd.f32 %v933, %v1371
    %v1374 = vtanh.pop %v1373
    %v1375 = vxor.u32 %v1373, 2147483648
    %v1376 = vmul.f32 %v1375, 1.442695
    %v1377 = vpow.pop %v1376
    %v1378 = vadd.f32 %v1377, 1.0
    %v1379 = vrcp.pop %v1378
    %v1380 = vmul.f32 1.0, %v1379
    %v1381 = vsel %vm79, %v1374, %v1380
    %v1383 = vrot.slane %v1381, 5
    %1385 = vrot.lane.b32.xlu0 %v1383, 64
    %v1386 = vpop.permute.xlu0 %1385
    %v1388 = vrot.slane %v1386, 3
    %v1390 = vmul.f32 %v1381, %v1388
    %v1392 = vrot.slane %v1320, 7
    %v1394 = vmul.f32 %v1381, %v1392
    %1396 = vrot.lane.b32.xlu0 %v1390, 96
    %v1397 = vpop.permute.xlu0 %1396
    %v1399 = vadd.f32 %v1394, %v1397
    %v1400 = vtanh.pop %v1399
    %v1402 = vrot.slane %v1400, 5
    %v1404 = vmul.f32 %v1386, %v1402
    %v1405 = vpack.c.bf16 %v1404, %v1404
    %v1407 = vsel %vm161, %v1405, 0
    %1409 = vmatprep.subr.bf16.mxu0 0
    %1410 = vmatpush1.bf16.msra.mxu0 %v946
    %1411 = vmatprep.subr.bf16.mxu0 0
    %1412 = vmatpush1.bf16.msra.mxu0 %v947
    %1413 = vmatprep.subr.bf16.mxu0 0
    %1414 = vmatpush1.bf16.msra.mxu0 0
    %1415 = vmatprep.subr.bf16.mxu0 0
    %1416 = vmatpush1.bf16.msra.mxu0 0
    %1417 = vmatprep.subr.bf16.mxu0 0
    %1418 = vmatpush1.bf16.msra.mxu0 0
    %1419 = vmatprep.subr.bf16.mxu0 0
    %1420 = vmatpush1.bf16.msra.mxu0 0
    %1421 = vmatprep.subr.bf16.mxu0 0
    %1422 = vmatpush1.bf16.msra.mxu0 0
    %1423 = vmatprep.subr.bf16.mxu0 0
    %1424 = vmatpush1.bf16.msra.mxu0 0
    %1425 = vmatprep.subr.bf16.mxu0 0
    %1426 = vmatpush1.bf16.msra.mxu0 0
    %1427 = vmatprep.subr.bf16.mxu0 0
    %1428 = vmatpush1.bf16.msra.mxu0 0
    %1429 = vmatprep.subr.bf16.mxu0 0
    %1430 = vmatpush1.bf16.msra.mxu0 0
    %1431 = vmatprep.subr.bf16.mxu0 0
    %1432 = vmatpush1.bf16.msra.mxu0 0
    %1433 = vmatprep.subr.bf16.mxu0 0
    %1434 = vmatpush1.bf16.msra.mxu0 0
    %1435 = vmatprep.subr.bf16.mxu0 0
    %1436 = vmatpush1.bf16.msra.mxu0 0
    %1437 = vmatprep.subr.bf16.mxu0 0
    %1438 = vmatpush1.bf16.msra.mxu0 0
    %1439 = vmatprep.subr.bf16.mxu0 0
    %1440 = vmatpush1.bf16.msra.mxu0 0
    %1441 = vmatprep.mubr.bf16.mxu0 0
    %1442 = vmatmul.mubr.bf16.gmra.mrb[0].mxu0 %v1407
    %v1443 = vpop.f32.mrb[0].mxu0
    %v1444 = vadd.f32 0.0, %v1443
    %v1445 = vpop.f32.mrb[0].mxu0
    %v1446 = vpop.f32.mrb[0].mxu0
    %v1447 = vpop.f32.mrb[0].mxu0
    %1448 = vdwg.mxu0
    %v1450 = vrot.slane %v1444, 2
    %v1452 = vadd.f32 %v933, %v1450
    %v1453 = vtanh.pop %v1452
    %v1454 = vxor.u32 %v1452, 2147483648
    %v1455 = vmul.f32 %v1454, 1.442695
    %v1456 = vpow.pop %v1455
    %v1457 = vadd.f32 %v1456, 1.0
    %v1458 = vrcp.pop %v1457
    %v1459 = vmul.f32 1.0, %v1458
    %v1460 = vsel %vm79, %v1453, %v1459
    %v1462 = vrot.slane %v1460, 6
    %1464 = vrot.lane.b32.xlu0 %v1462, 64
    %v1465 = vpop.permute.xlu0 %1464
    %v1467 = vrot.slane %v1465, 2
    %v1469 = vmul.f32 %v1460, %v1467
    %v1471 = vrot.slane %v1399, 7
    %v1473 = vmul.f32 %v1460, %v1471
    %1475 = vrot.lane.b32.xlu0 %v1469, 96
    %v1476 = vpop.permute.xlu0 %1475
    %v1478 = vadd.f32 %v1473, %v1476
    %v1479 = vtanh.pop %v1478
    %v1481 = vrot.slane %v1479, 6
    %v1483 = vmul.f32 %v1465, %v1481
    %v1484 = vpack.c.bf16 %v1483, %v1483
    %v1486 = vsel %vm161, %v1484, 0
    %1488 = vmatprep.subr.bf16.mxu0 0
    %1489 = vmatpush1.bf16.msra.mxu0 %v946
    %1490 = vmatprep.subr.bf16.mxu0 0
    %1491 = vmatpush1.bf16.msra.mxu0 %v947
    %1492 = vmatprep.subr.bf16.mxu0 0
    %1493 = vmatpush1.bf16.msra.mxu0 0
    %1494 = vmatprep.subr.bf16.mxu0 0
    %1495 = vmatpush1.bf16.msra.mxu0 0
    %1496 = vmatprep.subr.bf16.mxu0 0
    %1497 = vmatpush1.bf16.msra.mxu0 0
    %1498 = vmatprep.subr.bf16.mxu0 0
    %1499 = vmatpush1.bf16.msra.mxu0 0
    %1500 = vmatprep.subr.bf16.mxu0 0
    %1501 = vmatpush1.bf16.msra.mxu0 0
    %1502 = vmatprep.subr.bf16.mxu0 0
    %1503 = vmatpush1.bf16.msra.mxu0 0
    %1504 = vmatprep.subr.bf16.mxu0 0
    %1505 = vmatpush1.bf16.msra.mxu0 0
    %1506 = vmatprep.subr.bf16.mxu0 0
    %1507 = vmatpush1.bf16.msra.mxu0 0
    %1508 = vmatprep.subr.bf16.mxu0 0
    %1509 = vmatpush1.bf16.msra.mxu0 0
    %1510 = vmatprep.subr.bf16.mxu0 0
    %1511 = vmatpush1.bf16.msra.mxu0 0
    %1512 = vmatprep.subr.bf16.mxu0 0
    %1513 = vmatpush1.bf16.msra.mxu0 0
    %1514 = vmatprep.subr.bf16.mxu0 0
    %1515 = vmatpush1.bf16.msra.mxu0 0
    %1516 = vmatprep.subr.bf16.mxu0 0
    %1517 = vmatpush1.bf16.msra.mxu0 0
    %1518 = vmatprep.subr.bf16.mxu0 0
    %1519 = vmatpush1.bf16.msra.mxu0 0
    %1520 = vmatprep.mubr.bf16.mxu0 0
    %1521 = vmatmul.mubr.bf16.gmra.mrb[0].mxu0 %v1486
    %v1522 = vpop.f32.mrb[0].mxu0
    %v1523 = vadd.f32 0.0, %v1522
    %v1524 = vpop.f32.mrb[0].mxu0
    %v1525 = vpop.f32.mrb[0].mxu0
    %v1526 = vpop.f32.mrb[0].mxu0
    %1527 = vdwg.mxu0
    %v1529 = vrot.slane %v1523, 1
    %v1531 = vadd.f32 %v933, %v1529
    %v1532 = vtanh.pop %v1531
    %v1533 = vxor.u32 %v1531, 2147483648
    %v1534 = vmul.f32 %v1533, 1.442695
    %v1535 = vpow.pop %v1534
    %v1536 = vadd.f32 %v1535, 1.0
    %v1537 = vrcp.pop %v1536
    %v1538 = vmul.f32 1.0, %v1537
    %v1539 = vsel %vm79, %v1532, %v1538
    %v1541 = vrot.slane %v1539, 7
    %1543 = vrot.lane.b32.xlu0 %v1541, 64
    %v1544 = vpop.permute.xlu0 %1543
    %v1546 = vrot.slane %v1544, 1
    %v1548 = vmul.f32 %v1539, %v1546
    %v1550 = vrot.slane %v1478, 7
    %v1552 = vmul.f32 %v1539, %v1550
    %1554 = vrot.lane.b32.xlu0 %v1548, 96
    %v1555 = vpop.permute.xlu0 %1554
    %v1557 = vadd.f32 %v1552, %v1555
    %v1558 = vtanh.pop %v1557
    %v1560 = vrot.slane %v1558, 7
    %v1562 = vmul.f32 %v1544, %v1560
    %vm1563 = vcmask 253952
    %1564 = vst.msk [vmem:[#allocation9] sm:$0x1] %vm1563, %v1009
    %1565 = vst.msk [vmem:[#allocation9 + $0x1] sm:$0x1] %vm1563, %v1088
    %1566 = vst.msk [vmem:[#allocation9 + $0x2] sm:$0x1] %vm1563, %v1167
    %1567 = vst.msk [vmem:[#allocation9 + $0x3] sm:$0x1] %vm1563, %v1246
    %1568 = vst.msk [vmem:[#allocation9 + $0x4] sm:$0x1] %vm1563, %v1325
    %1569 = vst.msk [vmem:[#allocation9 + $0x5] sm:$0x1] %vm1563, %v1404
    %1570 = vst.msk [vmem:[#allocation9 + $0x6] sm:$0x1] %vm1563, %v1483
    %1571 = vst.msk [vmem:[#allocation9 + $0x7] sm:$0x1] %vm1563, %v1562
    %v1572 = vpack.c.bf16 %v1562, %v1562
    %v1573 = vld [vmem:[%s4] sm:$0xf]
    %v1574 = vld [vmem:[%s4 + $0x4] sm:$0xf]
    %v1575 = vld [vmem:[%s4 + $0x8] sm:$0xf]
    %v1576 = vld [vmem:[%s4 + $0xc] sm:$0xf]
    %v1577 = vld [vmem:[%s5] sm:$0x1]
    %v1579 = vlaneseq
    %v1580 = vshrl.u32 %v1579, 7
    %v1581 = vsub.s32 0, %v1580
    %v1582 = vrot.slane %v1577, %v1581
    %v1592 = vunpack.c.l.b16 %v1010
    %v1593 = vunpack.c.l.b16 %v1089
    %v1594 = vunpack.c.l.b16 %v1168
    %v1595 = vunpack.c.l.b16 %v1247
    %v1596 = vunpack.c.l.b16 %v1326
    %v1597 = vunpack.c.l.b16 %v1405
    %v1598 = vunpack.c.l.b16 %v1484
    %v1599 = vunpack.c.l.b16 %v1572
    %v1600 = vrot.slane %v1593, 7
    %v1601 = vsel %vm128, %v1600, %v1592
    %v1602 = vrot.slane %v1594, 6
    %v1603 = vsel %vm131, %v1602, %v1601
    %v1604 = vrot.slane %v1595, 5
    %v1605 = vsel %vm134, %v1604, %v1603
    %v1606 = vrot.slane %v1596, 4
    %v1607 = vsel %vm137, %v1606, %v1605
    %v1608 = vrot.slane %v1597, 3
    %v1609 = vsel %vm140, %v1608, %v1607
    %v1610 = vrot.slane %v1598, 2
    %v1611 = vsel %vm143, %v1610, %v1609
    %v1612 = vrot.slane %v1599, 1
    %v1613 = vsel %vm146, %v1612, %v1611
    %v1614 = vpack.c.b16 %v1613, %v1613
    %v1619 = vunpack.c.l.b16 %v1573
    %v1620 = vunpack.c.l.b16 %v1574
    %v1621 = vunpack.c.l.b16 %v1575
    %v1622 = vunpack.c.l.b16 %v1576
    %v1623 = vpack.c.b16 %v1620, %v1619
    %v1624 = vpack.c.b16 %v1622, %v1621
    %v1628 = vsel %vm161, %v1614, 0
    %1630 = vmatprep.subr.bf16.mxu0 0
    %1631 = vmatpush1.bf16.msra.mxu0 %v1623
    %1632 = vmatprep.subr.bf16.mxu0 0
    %1633 = vmatpush1.bf16.msra.mxu0 %v1624
    %1634 = vmatprep.subr.bf16.mxu0 0
    %1635 = vmatpush1.bf16.msra.mxu0 0
    %1636 = vmatprep.subr.bf16.mxu0 0
    %1637 = vmatpush1.bf16.msra.mxu0 0
    %1638 = vmatprep.subr.bf16.mxu0 0
    %1639 = vmatpush1.bf16.msra.mxu0 0
    %1640 = vmatprep.subr.bf16.mxu0 0
    %1641 = vmatpush1.bf16.msra.mxu0 0
    %1642 = vmatprep.subr.bf16.mxu0 0
    %1643 = vmatpush1.bf16.msra.mxu0 0
    %1644 = vmatprep.subr.bf16.mxu0 0
    %1645 = vmatpush1.bf16.msra.mxu0 0
    %1646 = vmatprep.subr.bf16.mxu0 0
    %1647 = vmatpush1.bf16.msra.mxu0 0
    %1648 = vmatprep.subr.bf16.mxu0 0
    %1649 = vmatpush1.bf16.msra.mxu0 0
    %1650 = vmatprep.subr.bf16.mxu0 0
    %1651 = vmatpush1.bf16.msra.mxu0 0
    %1652 = vmatprep.subr.bf16.mxu0 0
    %1653 = vmatpush1.bf16.msra.mxu0 0
    %1654 = vmatprep.subr.bf16.mxu0 0
    %1655 = vmatpush1.bf16.msra.mxu0 0
    %1656 = vmatprep.subr.bf16.mxu0 0
    %1657 = vmatpush1.bf16.msra.mxu0 0
    %1658 = vmatprep.subr.bf16.mxu0 0
    %1659 = vmatpush1.bf16.msra.mxu0 0
    %1660 = vmatprep.subr.bf16.mxu0 0
    %1661 = vmatpush1.bf16.msra.mxu0 0
    %1662 = vmatprep.mubr.bf16.mxu0 0
    %1663 = vmatmul.mubr.bf16.gmra.mrb[0].mxu0 %v1628
    %v1664 = vpop.f32.mrb[0].mxu0
    %v1665 = vadd.f32 %v1582, %v1664
    %v1666 = vpop.f32.mrb[0].mxu0
    %v1667 = vpop.f32.mrb[0].mxu0
    %v1668 = vpop.f32.mrb[0].mxu0
    %1669 = vdwg.mxu0
    %v1670 = vtanh.pop %v1665
    %v1672 = vcombine.high %v1670, %v1670
    %v1674 = vunpack.c.l.s4 1966171168
    %v1675 = vunpack.c.0.s8 %v1674
    %v1676 = vlaneseq
    %v1677 = vshrl.u32 %v1676, 7
    %v1678 = vsub.s32 %v1675, %v1677
    %v1679 = vrot.slane %v1670, %v1678
    %v1681 = vunpack.c.l.s4 1966171168
    %v1682 = vunpack.c.0.s8 %v1681
    %v1683 = vlaneseq
    %v1684 = vshrl.u32 %v1683, 7
    %v1685 = vsub.s32 %v1682, %v1684
    %v1686 = vrot.slane %v1672, %v1685
    %v1687 = vcombine.high %v1679, %v1679
    %v1688 = vcombine.high %v1686, %v1686
    %v1690 = vunpack.c.l.s4 1966171168
    %v1691 = vunpack.c.0.s8 %v1690
    %v1692 = vlaneseq
    %v1693 = vshrl.u32 %v1692, 7
    %v1694 = vsub.s32 %v1691, %v1693
    %v1695 = vrot.slane %v1679, %v1694
    %v1697 = vunpack.c.l.s4 1966171168
    %v1698 = vunpack.c.0.s8 %v1697
    %v1699 = vlaneseq
    %v1700 = vshrl.u32 %v1699, 7
    %v1701 = vsub.s32 %v1698, %v1700
    %v1702 = vrot.slane %v1686, %v1701
    %v1704 = vunpack.c.l.s4 1966171168
    %v1705 = vunpack.c.0.s8 %v1704
    %v1706 = vlaneseq
    %v1707 = vshrl.u32 %v1706, 7
    %v1708 = vsub.s32 %v1705, %v1707
    %v1709 = vrot.slane %v1687, %v1708
    %v1711 = vunpack.c.l.s4 1966171168
    %v1712 = vunpack.c.0.s8 %v1711
    %v1713 = vlaneseq
    %v1714 = vshrl.u32 %v1713, 7
    %v1715 = vsub.s32 %v1712, %v1714
    %v1716 = vrot.slane %v1688, %v1715
    %v1717 = vcombine.high %v1695, %v1695
    %v1718 = vcombine.high %v1702, %v1702
    %v1719 = vcombine.high %v1709, %v1709
    %v1720 = vcombine.high %v1716, %v1716
    %v1729 = vld [vmem:[%s6] sm:$0x1]
    %v1730 = vmul.f32 %v1695, %v1729
    %v1731 = vmul.f32 %v1709, %v1729
    %v1732 = vmul.f32 %v1717, %v1729
    %v1733 = vmul.f32 %v1719, %v1729
    %v1734 = vmul.f32 %v1702, %v1729
    %v1735 = vmul.f32 %v1716, %v1729
    %v1736 = vmul.f32 %v1718, %v1729
    %v1737 = vmul.f32 %v1720, %v1729
    %v1738 = vsel %vm1563, %v1730, 0.0
    %1739 = vadd.xlane.f32.xlu0 %v1738
    %v1740 = vpop.xlane.xlu0 %1739
    %v1741 = vsel %vm1563, %v1731, 0.0
    %1742 = vadd.xlane.f32.xlu0 %v1741
    %v1743 = vpop.xlane.xlu0 %1742
    %v1744 = vsel %vm1563, %v1732, 0.0
    %1745 = vadd.xlane.f32.xlu0 %v1744
    %v1746 = vpop.xlane.xlu0 %1745
    %v1747 = vsel %vm1563, %v1733, 0.0
    %1748 = vadd.xlane.f32.xlu0 %v1747
    %v1749 = vpop.xlane.xlu0 %1748
    %v1750 = vsel %vm1563, %v1734, 0.0
    %1751 = vadd.xlane.f32.xlu0 %v1750
    %v1752 = vpop.xlane.xlu0 %1751
    %v1753 = vsel %vm1563, %v1735, 0.0
    %1754 = vadd.xlane.f32.xlu0 %v1753
    %v1755 = vpop.xlane.xlu0 %1754
    %v1756 = vsel %vm1563, %v1736, 0.0
    %1757 = vadd.xlane.f32.xlu0 %v1756
    %v1758 = vpop.xlane.xlu0 %1757
    %v1759 = vsel %vm1563, %v1737, 0.0
    %1760 = vadd.xlane.f32.xlu0 %v1759
    %v1761 = vpop.xlane.xlu0 %1760
    %v1762 = vld [vmem:[#allocation2] sm:$0x1]
    %v1763 = vadd.f32 %v1740, %v1762
    %v1764 = vadd.f32 %v1743, %v1762
    %v1765 = vadd.f32 %v1746, %v1762
    %v1766 = vadd.f32 %v1749, %v1762
    %v1767 = vadd.f32 %v1752, %v1762
    %v1768 = vadd.f32 %v1755, %v1762
    %v1769 = vadd.f32 %v1758, %v1762
    %v1770 = vadd.f32 %v1761, %v1762
    %vm1771 = vcmask 0
    %v1772 = vsel %vm1771, %v1763, -inf
    %v1773 = vsel %vm1771, %v1764, -inf
    %v1774 = vsel %vm1771, %v1765, -inf
    %v1775 = vsel %vm1771, %v1766, -inf
    %v1776 = vsel %vm1771, %v1767, -inf
    %v1777 = vmax.f32 %v1772, %v1776
    %v1778 = vsel %vm1771, %v1768, -inf
    %v1779 = vmax.f32 %v1773, %v1778
    %v1780 = vsel %vm1771, %v1769, -inf
    %v1781 = vmax.f32 %v1774, %v1780
    %v1782 = vsel %vm1771, %v1770, -inf
    %v1783 = vmax.f32 %v1775, %v1782
    %v1784 = vmax.f32 %v1777, %v1779
    %v1785 = vmax.f32 %v1781, %v1783
    %v1786 = vmax.f32 %v1784, %v1785
    %v1787 = vsub.f32 %v1763, %v1786
    %v1788 = vsub.f32 %v1764, %v1786
    %v1789 = vsub.f32 %v1765, %v1786
    %v1790 = vsub.f32 %v1766, %v1786
    %v1791 = vsub.f32 %v1767, %v1786
    %v1792 = vsub.f32 %v1768, %v1786
    %v1793 = vsub.f32 %v1769, %v1786
    %v1794 = vsub.f32 %v1770, %v1786
    %v1795 = vmul.f32 %v1787, 1.442695
    %v1796 = vpow.pop %v1795
    %v1797 = vmul.f32 %v1788, 1.442695
    %v1798 = vpow.pop %v1797
    %v1799 = vmul.f32 %v1789, 1.442695
    %v1800 = vpow.pop %v1799
    %v1801 = vmul.f32 %v1790, 1.442695
    %v1802 = vpow.pop %v1801
    %v1803 = vmul.f32 %v1791, 1.442695
    %v1804 = vpow.pop %v1803
    %v1805 = vmul.f32 %v1792, 1.442695
    %v1806 = vpow.pop %v1805
    %v1807 = vmul.f32 %v1793, 1.442695
    %v1808 = vpow.pop %v1807
    %v1809 = vmul.f32 %v1794, 1.442695
    %v1810 = vpow.pop %v1809
    %v1811 = vsel %vm1771, %v1796, 0.0
    %v1812 = vsel %vm1771, %v1798, 0.0
    %v1813 = vadd.f32 %v1811, %v1812
    %v1814 = vsel %vm1771, %v1800, 0.0
    %v1815 = vadd.f32 %v1813, %v1814
    %v1816 = vsel %vm1771, %v1802, 0.0
    %v1817 = vadd.f32 %v1815, %v1816
    %v1818 = vsel %vm1771, %v1804, 0.0
    %v1819 = vadd.f32 %v1817, %v1818
    %v1820 = vsel %vm1771, %v1806, 0.0
    %v1821 = vadd.f32 %v1819, %v1820
    %v1822 = vsel %vm1771, %v1808, 0.0
    %v1823 = vadd.f32 %v1821, %v1822
    %v1824 = vsel %vm1771, %v1810, 0.0
    %v1825 = vadd.f32 %v1823, %v1824
    %v1826 = vrcp.pop %v1825
    %v1827 = vmul.f32 %v1796, %v1826
    %v1828 = vmul.f32 %v1798, %v1826
    %v1829 = vmul.f32 %v1800, %v1826
    %v1830 = vmul.f32 %v1802, %v1826
    %v1831 = vmul.f32 %v1804, %v1826
    %v1832 = vmul.f32 %v1806, %v1826
    %v1833 = vmul.f32 %v1808, %v1826
    %v1834 = vmul.f32 %v1810, %v1826
    %1836 = vset.pattern.permute.xlu0 0
    %1837 = vperm.xlu0 %1836, %v1827
    %v1838 = vpop.permute.xlu0 %1837
    %1841 = vset.pattern.permute.xlu0 0
    %1842 = vperm.xlu0 %1841, %v1828
    %v1843 = vpop.permute.xlu0 %1842
    %1846 = vset.pattern.permute.xlu0 0
    %1847 = vperm.xlu0 %1846, %v1829
    %v1848 = vpop.permute.xlu0 %1847
    %1851 = vset.pattern.permute.xlu0 0
    %1852 = vperm.xlu0 %1851, %v1830
    %v1853 = vpop.permute.xlu0 %1852
    %1856 = vset.pattern.permute.xlu0 0
    %1857 = vperm.xlu0 %1856, %v1831
    %v1858 = vpop.permute.xlu0 %1857
    %1861 = vset.pattern.permute.xlu0 0
    %1862 = vperm.xlu0 %1861, %v1832
    %v1863 = vpop.permute.xlu0 %1862
    %1866 = vset.pattern.permute.xlu0 0
    %1867 = vperm.xlu0 %1866, %v1833
    %v1868 = vpop.permute.xlu0 %1867
    %1871 = vset.pattern.permute.xlu0 0
    %1872 = vperm.xlu0 %1871, %v1834
    %v1873 = vpop.permute.xlu0 %1872
    %v1875 = vmul.f32 %v1009, %v1838
    %v1876 = vmul.f32 %v1088, %v1843
    %v1877 = vmul.f32 %v1167, %v1848
    %v1878 = vmul.f32 %v1246, %v1853
    %v1879 = vmul.f32 %v1325, %v1858
    %v1880 = vmul.f32 %v1404, %v1863
    %v1881 = vmul.f32 %v1483, %v1868
    %v1882 = vmul.f32 %v1562, %v1873
    %v1883 = vsel %vm1563, %v1875, 0.0
    %v1884 = vsel %vm1563, %v1876, 0.0
    %v1885 = vadd.f32 %v1883, %v1884
    %v1886 = vsel %vm1563, %v1877, 0.0
    %v1887 = vadd.f32 %v1885, %v1886
    %v1888 = vsel %vm1563, %v1878, 0.0
    %v1889 = vadd.f32 %v1887, %v1888
    %v1890 = vsel %vm1563, %v1879, 0.0
    %v1891 = vadd.f32 %v1889, %v1890
    %v1892 = vsel %vm1563, %v1880, 0.0
    %v1893 = vadd.f32 %v1891, %v1892
    %v1894 = vsel %vm1563, %v1881, 0.0
    %v1895 = vadd.f32 %v1893, %v1894
    %v1896 = vsel %vm1563, %v1882, 0.0
    %v1897 = vadd.f32 %v1895, %v1896
    %1898 = vst.msk [vmem:[#allocation10] sm:$0x1] %vm1563, %v1897
    // Predicated region
    $region46: #{tpu_custom_call.1} parent=1 // pred_check
      _
    $region47: #{tpu_custom_call.1} parent=1 // pred_check_branch
      %1900 = sbr.rel (0) target = $region49
    $region48: #{tpu_custom_call.1} parent=1 // pred_region
      %s1902 = ssub.s32 128, 128
      %1903 = vsyncadd [#allocation5], %s1902
      %s1904 = sshll.u32 [#allocation9], 4
      %s1905 = int_to_ptr.vmem [resolvable:$true] %s1904
      %1910 = dma.vmem_to_hbm [thread:$0]  %s1905, 128, %s8, [#allocation5], 16, 16, 1
    $region49: #{tpu_custom_call.1} parent=1 // pred_fallthru
      _
    // Predicated region
    $region50: #{tpu_custom_call.1} parent=1 // pred_check
      _
    $region51: #{tpu_custom_call.1} parent=1 // pred_check_branch
      %1912 = sbr.rel (0) target = $region53
    $region52: #{tpu_custom_call.1} parent=1 // pred_region
      %s1914 = ssub.s32 16, 16
      %1915 = vsyncadd [#allocation11], %s1914
      %s1917 = sshll.u32 [#allocation10], 4
      %s1918 = int_to_ptr.vmem [resolvable:$true] %s1917
      %1920 = dma.vmem_to_hbm [thread:$0]  %s1918, 16, %s9, [#allocation11]
    $region53: #{tpu_custom_call.1} parent=1 // pred_fallthru
      _
    // Predicated region
    $region54: #{tpu_custom_call.1} parent=1 // pred_check
      _
    $region55: #{tpu_custom_call.1} parent=1 // pred_check_branch
      %1922 = sbr.rel (0) target = $region57
    $region56: #{tpu_custom_call.1} parent=1 // pred_region
      %1923 = dma.done [#allocation5], 128
    $region57: #{tpu_custom_call.1} parent=1 // pred_fallthru
      _
    // Predicated region
    $region58: #{tpu_custom_call.1} parent=1 // pred_check
      _
    $region59: #{tpu_custom_call.1} parent=1 // pred_check_branch
      %1925 = sbr.rel (0) target = $region61
    $region60: #{tpu_custom_call.1} parent=1 // pred_region
      %1926 = dma.done [#allocation11], 16
    $region61: #{tpu_custom_call.1} parent=1 // pred_fallthru
      _
    %1927 = vsyncpa [#allocation4], 1
    %1928 = vsyncpa [#allocation7], 1
    %1929 = vsyncpa [#allocation5], 1
    %1930 = vsyncpa [#allocation11], 1

</llo_original>
